<compile_context>
chip_gen: v6e
topology: v6e:2x2x1
jax: 0.10.0
libtpu: 0.0.40
codegen_flags: <defaults>
</compile_context>

<pallas_src>
import jax
import jax.numpy as jnp
from jax.experimental import pallas as pl
from jax.experimental.pallas import tpu as pltpu


def _round_up(x, m):
    return -(-x // m) * m


# ----------------------------------------------------------------------------
# Fused kernel. One grid step processes TM low-res pixels and emits the full
# (TM, 4*Cout) lane-dense slab (columns ordered corner-major: 2*dh+dw).
# ----------------------------------------------------------------------------
def _upsampling_bottleneck_kernel(
    x_ref, code_ref,
    wm_ref, bm_ref,
    we1_ref, be1_ref,
    wtp_ref, btp_ref,
    we2p_ref, be2p_ref,
    out_ref,
):
    x = x_ref[...]                                   # (TM, Cin)  bf16
    codes = code_ref[...].astype(jnp.int32)          # (TM, Cout) int8 -> int32

    # main branch: 1x1 conv + folded BN (no activation); f32 accumulation.
    main_lo = (jnp.dot(x, wm_ref[...], preferred_element_type=jnp.float32)
               + bm_ref[...])                        # (TM, Cout) f32

    # ext projection: 1x1 conv + folded BN + ReLU.
    ext1 = jnp.maximum(
        jnp.dot(x, we1_ref[...], preferred_element_type=jnp.float32) + be1_ref[...],
        0.0)                                          # (TM, Cint) f32

    # ConvTranspose2d(2,2,s=2): 4 non-overlapping taps packed into one matmul.
    ext_t = jnp.maximum(
        jnp.dot(ext1.astype(jnp.bfloat16), wtp_ref[...],
                preferred_element_type=jnp.float32) + btp_ref[...],
        0.0)                                          # (TM, 4*Cint) f32

    # expansion 1x1 conv as one block-diagonal matmul; Dropout2d(p=0) == identity.
    ext2 = jnp.maximum(
        jnp.dot(ext_t.astype(jnp.bfloat16), we2p_ref[...],
                preferred_element_type=jnp.float32) + be2p_ref[...],
        0.0)                                          # (TM, 4*Cout) f32

    # MaxUnpool2d: the main value lands only at its stored corner (code == 2*dh+dw).
    main_slab = jnp.concatenate(
        [jnp.where(codes == c, main_lo, 0.0) for c in range(4)], axis=-1)

    # residual merge + output ReLU; single unmasked 128-lane-dense store.
    out_ref[...] = jnp.maximum(main_slab + ext2, 0.0)


# ----------------------------------------------------------------------------
# Parameter construction (deterministic, synthetic). Canonical f32 / PyTorch
# orientation, with BN scales folded into the weight columns.
# ----------------------------------------------------------------------------
def make_params(key, in_channels, out_channels, internal_ratio=4, eps=1e-5):
    cint = in_channels // internal_ratio
    ks = jax.random.split(key, 8)

    def conv_w(k, shape):
        return 0.1 * jax.random.normal(k, shape, jnp.float32)

    def bn_fold(k, c):
        kg, kb, km, kv = jax.random.split(k, 4)
        gamma = 1.0 + 0.1 * jax.random.normal(kg, (c,), jnp.float32)
        beta = 0.1 * jax.random.normal(kb, (c,), jnp.float32)
        mean = 0.1 * jax.random.normal(km, (c,), jnp.float32)
        var = 1.0 + jnp.abs(jax.random.normal(kv, (c,), jnp.float32))
        scale = gamma / jnp.sqrt(var + eps)
        bias = beta - mean * scale
        return scale, bias

    # PyTorch-layout weights
    w_main = conv_w(ks[0], (out_channels, in_channels, 1, 1))  # main_conv1 Conv2d
    w_e1 = conv_w(ks[1], (cint, in_channels, 1, 1))            # ext_conv1 Conv2d
    w_t = conv_w(ks[2], (cint, cint, 2, 2))                    # ext_tconv1 ConvTranspose2d
    w_e2 = conv_w(ks[3], (out_channels, cint, 1, 1))           # ext_conv2 Conv2d

    s_m, b_m = bn_fold(ks[4], out_channels)
    s_e1, b_e1 = bn_fold(ks[5], cint)
    s_t, b_t = bn_fold(ks[6], cint)
    s_e2, b_e2 = bn_fold(ks[7], out_channels)

    wm = w_main[:, :, 0, 0].T * s_m[None, :]                   # (Cin,  Cout)
    we1 = w_e1[:, :, 0, 0].T * s_e1[None, :]                   # (Cin,  Cint)
    wt = jnp.stack(
        [w_t[:, :, kh, kw] * s_t[None, :] for kh in range(2) for kw in range(2)],
        axis=0)                                                # (4, Cint, Cint)
    we2 = w_e2[:, :, 0, 0].T * s_e2[None, :]                   # (Cint, Cout)

    return {
        "wm": wm, "bm": b_m.reshape(1, -1),
        "we1": we1, "be1": b_e1.reshape(1, -1),
        "wt": wt, "bt": b_t.reshape(1, -1),
        "we2": we2, "be2": b_e2.reshape(1, -1),
    }


# ----------------------------------------------------------------------------
# One-time weight re-layout for the kernel (hoisted out of the forward path):
# pack the 4 tconv taps side-by-side, make the expansion matmul block-diagonal,
# and cast matmul operands to bf16 (biases stay f32 for the f32 epilogue).
# ----------------------------------------------------------------------------
def pack_params_for_kernel(p):
    cint = p["we1"].shape[1]
    cout = p["wm"].shape[1]
    wt_packed = jnp.concatenate([p["wt"][c] for c in range(4)], axis=1)   # (Cint, 4*Cint)
    bt_packed = jnp.tile(p["bt"], (1, 4))                                 # (1, 4*Cint)
    zeros = jnp.zeros((cint, cout), jnp.float32)
    rows = []
    for c in range(4):
        blocks = [zeros] * 4
        blocks[c] = p["we2"]
        rows.append(jnp.concatenate(blocks, axis=1))
    we2_blk = jnp.concatenate(rows, axis=0)                               # (4*Cint, 4*Cout)
    be2_packed = jnp.tile(p["be2"], (1, 4))                               # (1, 4*Cout)
    return {
        "wm": p["wm"].astype(jnp.bfloat16), "bm": p["bm"],
        "we1": p["we1"].astype(jnp.bfloat16), "be1": p["be1"],
        "wtp": wt_packed.astype(jnp.bfloat16), "btp": bt_packed,
        "we2p": we2_blk.astype(jnp.bfloat16), "be2p": be2_packed,
    }


# ----------------------------------------------------------------------------
# Forward pass wrapper (NCHW in / NCHW out, matching the PyTorch module).
# ----------------------------------------------------------------------------
def upsampling_bottleneck(x_nchw, max_indices_nchw, kparams, output_size, *, tile_m=1024):
    N, Cin, H, W = x_nchw.shape
    Cout = kparams["wm"].shape[1]
    Cint = kparams["we1"].shape[1]
    H_out, W_out = output_size
    assert (H_out, W_out) == (2 * H, 2 * W), "only output_size == 2x input supported"
    assert H_out * W_out < 2 ** 31, "flat unpool indices must fit in int32"

    # NHWC, bf16 activations for the MXU (elementwise math stays f32 in-kernel).
    x = jnp.transpose(x_nchw, (0, 2, 3, 1)).astype(jnp.bfloat16)            # (N,H,W,Cin)
    idx = jnp.transpose(max_indices_nchw, (0, 2, 3, 1)).astype(jnp.int32)   # (N,H,W,Cout)
    # 2-bit corner code (2*dh + dw) per (pixel, channel) as int8: 4x less HBM
    # traffic than raw int32 indices and no per-tile base column needed.
    # idx = (2h+dh)*W_out + (2w+dw), W_out even  =>  dh = (idx//W_out)%2, dw = idx%2.
    codes = (((idx // W_out) % 2) * 2 + (idx % 2)).astype(jnp.int8)

    M = N * H * W
    x_mat = x.reshape(M, Cin)
    code_mat = codes.reshape(M, Cout)

    # Spatial tile: big (bandwidth-bound), sublane-aligned, but keep >= 2 grid
    # steps so the "parallel" axis can shard across v7x's two TensorCores.
    TM = max(8, min(_round_up(tile_m, 8), _round_up(M, 8)))
    if TM >= M and M > 8:
        TM = max(8, _round_up(-(-M // 2), 8))
    M_pad = _round_up(M, TM)
    if M_pad != M:
        pad = M_pad - M
        x_mat = jnp.pad(x_mat, ((0, pad), (0, 0)))
        code_mat = jnp.pad(code_mat, ((0, pad), (0, 0)), constant_values=-1)

    grid = (M_pad // TM,)

    def row_spec(shape):
        return pl.BlockSpec(shape, lambda i: (i, 0))

    def full2(shape):
        return pl.BlockSpec(shape, lambda i: (0, 0))

    out_mat = pl.pallas_call(
        _upsampling_bottleneck_kernel,
        out_shape=jax.ShapeDtypeStruct((M_pad, 4 * Cout), jnp.float32),
        grid=grid,
        in_specs=[
            row_spec((TM, Cin)),                          # x (bf16)
            row_spec((TM, Cout)),                         # corner codes (int8)
            full2((Cin, Cout)), full2((1, Cout)),         # main conv (BN folded) + bias
            full2((Cin, Cint)), full2((1, Cint)),         # ext conv1
            full2((Cint, 4 * Cint)), full2((1, 4 * Cint)),  # packed tconv taps + bias
            full2((4 * Cint, 4 * Cout)), full2((1, 4 * Cout)),  # block-diag expansion
        ],
        out_specs=row_spec((TM, 4 * Cout)),
        compiler_params=pltpu.CompilerParams(
            dimension_semantics=("parallel",),
            vmem_limit_bytes=32 * 1024 * 1024,
        ),
    )(x_mat, code_mat,
      kparams["wm"], kparams["bm"],
      kparams["we1"], kparams["be1"],
      kparams["wtp"], kparams["btp"],
      kparams["we2p"], kparams["be2p"])

    # (M, 4*Cout): columns are corners [(0,0) | (0,1) | (1,0) | (1,1)].
    # The module's NCHW return forces one output copy anyway, so the corner
    # interleave and channels-first permutation are merged into ONE transpose.
    out = out_mat[:M].reshape(N, H, W, 2, 2, Cout)        # (n,h,w,dh,dw,c)
    out = out.transpose(0, 5, 1, 3, 2, 4).reshape(N, Cout, H_out, W_out)
    return out


# ----------------------------------------------------------------------------
# Pure-JAX reference (per-corner formulation, raw indices, plain XLA ops).
# Matmul operands are cast to bf16 with f32 accumulation to mirror the kernel's
# MXU dots; everything else is f32.
# ----------------------------------------------------------------------------
def _reference(x_nchw, max_indices_nchw, p, output_size):
    N, Cin, H, W = x_nchw.shape
    H_out, W_out = output_size
    Cout = p["wm"].shape[1]
    x = jnp.transpose(x_nchw, (0, 2, 3, 1)).astype(jnp.float32)
    idx = jnp.transpose(max_indices_nchw, (0, 2, 3, 1)).astype(jnp.int32)

    def mm(a, w):
        return jnp.einsum("nhwc,cd->nhwd", a.astype(jnp.bfloat16),
                          w.astype(jnp.bfloat16),
                          preferred_element_type=jnp.float32)

    main_lo = mm(x, p["wm"]) + p["bm"][0]
    ext1 = jnp.maximum(mm(x, p["we1"]) + p["be1"][0], 0.0)

    hh = jnp.arange(H, dtype=jnp.int32)[:, None]
    ww = jnp.arange(W, dtype=jnp.int32)[None, :]
    base = (2 * hh) * W_out + 2 * ww

    rows = []
    for dh in range(2):
        cols = []
        for dw in range(2):
            wt = p["wt"][2 * dh + dw]
            ext_t = jnp.maximum(mm(ext1, wt) + p["bt"][0], 0.0)
            ext2 = jnp.maximum(mm(ext_t, p["we2"]) + p["be2"][0], 0.0)
            sel = idx == (base + dh * W_out + dw)[None, :, :, None]
            main_c = jnp.where(sel, main_lo, 0.0)
            cols.append(jnp.maximum(main_c + ext2, 0.0))
        rows.append(jnp.stack(cols, axis=3))           # (N,H,W,2[dw],Cout)
    out = jnp.stack(rows, axis=3)                       # (N,H,W,2[dh],2[dw],Cout)
    out = out.transpose(0, 1, 3, 2, 4, 5).reshape(N, H_out, W_out, Cout)
    return jnp.transpose(out, (0, 3, 1, 2))


if __name__ == "__main__":
    key = jax.random.PRNGKey(0)
    k_x, k_i, k_p = jax.random.split(key, 3)

    # small shapes: batch=2, in=32, out=32, low-res spatial 16 -> output 32
    N, Cin, Cout, ratio = 2, 32, 32, 4
    H = W = 16
    H_out, W_out = 2 * H, 2 * W

    x = jax.random.normal(k_x, (N, Cin, H, W), jnp.float32)

    # valid MaxPool2d(2,2) indices: one position inside each 2x2 output window
    k_dh, k_dw = jax.random.split(k_i)
    dh = jax.random.randint(k_dh, (N, Cout, H, W), 0, 2, dtype=jnp.int32)
    dw = jax.random.randint(k_dw, (N, Cout, H, W), 0, 2, dtype=jnp.int32)
    hh = jnp.arange(H, dtype=jnp.int32)[None, None, :, None]
    ww = jnp.arange(W, dtype=jnp.int32)[None, None, None, :]
    max_indices = (2 * hh + dh) * W_out + (2 * ww + dw)

    params = make_params(k_p, Cin, Cout, internal_ratio=ratio)
    kparams = pack_params_for_kernel(params)

    out = upsampling_bottleneck(x, max_indices, kparams, (H_out, W_out), tile_m=1024)
    jax.block_until_ready(out)

    assert out.shape == (N, Cout, H_out, W_out)

    ref = _reference(x, max_indices, params, (H_out, W_out))
    err = float(jnp.max(jnp.abs(out - ref)))
    assert err < 1e-2, f"max abs error {err}"

    print("KERNEL_OK")
</pallas_src>

<mosaic_0001>
module attributes {stable_mosaic.version = 11 : i64} {
  func.func @_upsampling_bottleneck_kernel(%arg0: i32, %arg1: memref<256x32xbf16, #tpu.memory_space<vmem>>, %arg2: memref<256x32xi8, #tpu.memory_space<vmem>>, %arg3: memref<32x32xbf16, #tpu.memory_space<vmem>>, %arg4: memref<1x32xf32, #tpu.memory_space<vmem>>, %arg5: memref<32x8xbf16, #tpu.memory_space<vmem>>, %arg6: memref<1x8xf32, #tpu.memory_space<vmem>>, %arg7: memref<8x32xbf16, #tpu.memory_space<vmem>>, %arg8: memref<1x32xf32, #tpu.memory_space<vmem>>, %arg9: memref<32x128xbf16, #tpu.memory_space<vmem>>, %arg10: memref<1x128xf32, #tpu.memory_space<vmem>>, %arg11: memref<256x128xf32, #tpu.memory_space<vmem>>) attributes {dimension_semantics = [#tpu.dimension_semantics<parallel>], iteration_bounds = array<i64: 2>, scalar_prefetch = 0 : i64, scratch_operands = 0 : i64, tpu.core_type = #tpu.core_type<tc>, window_params = [{transform_indices = @transform_0, window_bounds = array<i64: 256, 32>}, {transform_indices = @transform_1, window_bounds = array<i64: 256, 32>}, {pipeline_mode = #tpu.pipeline_mode<synchronous>, transform_indices = @transform_2, window_bounds = array<i64: 32, 32>}, {pipeline_mode = #tpu.pipeline_mode<synchronous>, transform_indices = @transform_3, window_bounds = array<i64: 1, 32>}, {pipeline_mode = #tpu.pipeline_mode<synchronous>, transform_indices = @transform_4, window_bounds = array<i64: 32, 8>}, {pipeline_mode = #tpu.pipeline_mode<synchronous>, transform_indices = @transform_5, window_bounds = array<i64: 1, 8>}, {pipeline_mode = #tpu.pipeline_mode<synchronous>, transform_indices = @transform_6, window_bounds = array<i64: 8, 32>}, {pipeline_mode = #tpu.pipeline_mode<synchronous>, transform_indices = @transform_7, window_bounds = array<i64: 1, 32>}, {pipeline_mode = #tpu.pipeline_mode<synchronous>, transform_indices = @transform_8, window_bounds = array<i64: 32, 128>}, {pipeline_mode = #tpu.pipeline_mode<synchronous>, transform_indices = @transform_9, window_bounds = array<i64: 1, 128>}, {transform_indices = @transform_10, window_bounds = array<i64: 256, 128>}]} {
    %c0 = arith.constant 0 : index
    %c0_0 = arith.constant 0 : index
    %0 = vector.load %arg1[%c0, %c0_0] : memref<256x32xbf16, #tpu.memory_space<vmem>>, vector<256x32xbf16>
    %c0_1 = arith.constant 0 : index
    %c0_2 = arith.constant 0 : index
    %1 = vector.load %arg2[%c0_1, %c0_2] : memref<256x32xi8, #tpu.memory_space<vmem>>, vector<256x32xi8>
    %2 = arith.extsi %1 : vector<256x32xi8> to vector<256x32xi32>
    %c0_3 = arith.constant 0 : index
    %c0_4 = arith.constant 0 : index
    %3 = vector.load %arg3[%c0_3, %c0_4] : memref<32x32xbf16, #tpu.memory_space<vmem>>, vector<32x32xbf16>
    %cst = arith.constant dense<0.000000e+00> : vector<256x32xf32>
    %4 = tpu.matmul %0, %3, %cst {dimension_numbers = #tpu.dot_dimension_numbers<[1], [0], [0], [1], [0, 0, 1, 1], [], []>} : vector<256x32xbf16>, vector<32x32xbf16>, vector<256x32xf32> -> vector<256x32xf32>
    %c0_5 = arith.constant 0 : index
    %c0_6 = arith.constant 0 : index
    %5 = vector.load %arg4[%c0_5, %c0_6] : memref<1x32xf32, #tpu.memory_space<vmem>>, vector<1x32xf32>
    %6 = vector.broadcast %5 : vector<1x32xf32> to vector<256x32xf32>
    %7 = arith.addf %4, %6 : vector<256x32xf32>
    %c0_7 = arith.constant 0 : index
    %c0_8 = arith.constant 0 : index
    %8 = vector.load %arg5[%c0_7, %c0_8] : memref<32x8xbf16, #tpu.memory_space<vmem>>, vector<32x8xbf16>
    %cst_9 = arith.constant dense<0.000000e+00> : vector<256x8xf32>
    %9 = tpu.matmul %0, %8, %cst_9 {dimension_numbers = #tpu.dot_dimension_numbers<[1], [0], [0], [1], [0, 0, 1, 1], [], []>} : vector<256x32xbf16>, vector<32x8xbf16>, vector<256x8xf32> -> vector<256x8xf32>
    %c0_10 = arith.constant 0 : index
    %c0_11 = arith.constant 0 : index
    %10 = vector.load %arg6[%c0_10, %c0_11] : memref<1x8xf32, #tpu.memory_space<vmem>>, vector<1x8xf32>
    %11 = vector.broadcast %10 : vector<1x8xf32> to vector<256x8xf32>
    %12 = arith.addf %9, %11 : vector<256x8xf32>
    %cst_12 = arith.constant 0.000000e+00 : f32
    %13 = vector.broadcast %cst_12 : f32 to vector<256x8xf32>
    %14 = arith.maximumf %12, %13 : vector<256x8xf32>
    %15 = arith.truncf %14 : vector<256x8xf32> to vector<256x8xbf16>
    %c0_13 = arith.constant 0 : index
    %c0_14 = arith.constant 0 : index
    %16 = vector.load %arg7[%c0_13, %c0_14] : memref<8x32xbf16, #tpu.memory_space<vmem>>, vector<8x32xbf16>
    %cst_15 = arith.constant dense<0.000000e+00> : vector<256x32xf32>
    %17 = tpu.matmul %15, %16, %cst_15 {dimension_numbers = #tpu.dot_dimension_numbers<[1], [0], [0], [1], [0, 0, 1, 1], [], []>} : vector<256x8xbf16>, vector<8x32xbf16>, vector<256x32xf32> -> vector<256x32xf32>
    %c0_16 = arith.constant 0 : index
    %c0_17 = arith.constant 0 : index
    %18 = vector.load %arg8[%c0_16, %c0_17] : memref<1x32xf32, #tpu.memory_space<vmem>>, vector<1x32xf32>
    %19 = vector.broadcast %18 : vector<1x32xf32> to vector<256x32xf32>
    %20 = arith.addf %17, %19 : vector<256x32xf32>
    %cst_18 = arith.constant 0.000000e+00 : f32
    %21 = vector.broadcast %cst_18 : f32 to vector<256x32xf32>
    %22 = arith.maximumf %20, %21 : vector<256x32xf32>
    %23 = arith.truncf %22 : vector<256x32xf32> to vector<256x32xbf16>
    %c0_19 = arith.constant 0 : index
    %c0_20 = arith.constant 0 : index
    %24 = vector.load %arg9[%c0_19, %c0_20] : memref<32x128xbf16, #tpu.memory_space<vmem>>, vector<32x128xbf16>
    %cst_21 = arith.constant dense<0.000000e+00> : vector<256x128xf32>
    %25 = tpu.matmul %23, %24, %cst_21 {dimension_numbers = #tpu.dot_dimension_numbers<[1], [0], [0], [1], [0, 0, 1, 1], [], []>} : vector<256x32xbf16>, vector<32x128xbf16>, vector<256x128xf32> -> vector<256x128xf32>
    %c0_22 = arith.constant 0 : index
    %c0_23 = arith.constant 0 : index
    %26 = vector.load %arg10[%c0_22, %c0_23] : memref<1x128xf32, #tpu.memory_space<vmem>>, vector<1x128xf32>
    %27 = vector.broadcast %26 : vector<1x128xf32> to vector<256x128xf32>
    %28 = arith.addf %25, %27 : vector<256x128xf32>
    %cst_24 = arith.constant 0.000000e+00 : f32
    %29 = vector.broadcast %cst_24 : f32 to vector<256x128xf32>
    %30 = arith.maximumf %28, %29 : vector<256x128xf32>
    %c0_i32 = arith.constant 0 : i32
    %31 = vector.broadcast %c0_i32 : i32 to vector<256x32xi32>
    %32 = arith.cmpi eq, %2, %31 : vector<256x32xi32>
    %cst_25 = arith.constant 0.000000e+00 : f32
    %33 = vector.broadcast %cst_25 : f32 to vector<256x32xf32>
    %34 = arith.select %32, %7, %33 : vector<256x32xi1>, vector<256x32xf32>
    %c1_i32 = arith.constant 1 : i32
    %35 = vector.broadcast %c1_i32 : i32 to vector<256x32xi32>
    %36 = arith.cmpi eq, %2, %35 : vector<256x32xi32>
    %cst_26 = arith.constant 0.000000e+00 : f32
    %37 = vector.broadcast %cst_26 : f32 to vector<256x32xf32>
    %38 = arith.select %36, %7, %37 : vector<256x32xi1>, vector<256x32xf32>
    %c2_i32 = arith.constant 2 : i32
    %39 = vector.broadcast %c2_i32 : i32 to vector<256x32xi32>
    %40 = arith.cmpi eq, %2, %39 : vector<256x32xi32>
    %cst_27 = arith.constant 0.000000e+00 : f32
    %41 = vector.broadcast %cst_27 : f32 to vector<256x32xf32>
    %42 = arith.select %40, %7, %41 : vector<256x32xi1>, vector<256x32xf32>
    %c3_i32 = arith.constant 3 : i32
    %43 = vector.broadcast %c3_i32 : i32 to vector<256x32xi32>
    %44 = arith.cmpi eq, %2, %43 : vector<256x32xi32>
    %cst_28 = arith.constant 0.000000e+00 : f32
    %45 = vector.broadcast %cst_28 : f32 to vector<256x32xf32>
    %46 = arith.select %44, %7, %45 : vector<256x32xi1>, vector<256x32xf32>
    %47 = tpu.concatenate %34, %38, %42, %46 in 1 : vector<256x32xf32>, vector<256x32xf32>, vector<256x32xf32>, vector<256x32xf32> -> vector<256x128xf32>
    %48 = arith.addf %47, %30 : vector<256x128xf32>
    %cst_29 = arith.constant 0.000000e+00 : f32
    %49 = vector.broadcast %cst_29 : f32 to vector<256x128xf32>
    %50 = arith.maximumf %48, %49 : vector<256x128xf32>
    %c0_30 = arith.constant 0 : index
    %c0_31 = arith.constant 0 : index
    %51 = vector.load %arg11[%c0_30, %c0_31] : memref<256x128xf32, #tpu.memory_space<vmem>>, vector<256x128xf32>
    tpu.vector_store %arg11[%c0_30, %c0_31], %50 {strides = array<i32>} : memref<256x128xf32, #tpu.memory_space<vmem>>, vector<256x128xf32>,
    return
  }
  func.func @transform_0(%arg0: i32) -> (i32, i32) {
    %c0_i32 = arith.constant 0 : i32
    %c0_i32_0 = arith.constant 0 : i32
    return %arg0, %c0_i32 : i32, i32
  }
  func.func @transform_1(%arg0: i32) -> (i32, i32) {
    %c0_i32 = arith.constant 0 : i32
    %c0_i32_0 = arith.constant 0 : i32
    return %arg0, %c0_i32 : i32, i32
  }
  func.func @transform_2(%arg0: i32) -> (i32, i32) {
    %c0_i32 = arith.constant 0 : i32
    %c0_i32_0 = arith.constant 0 : i32
    %c0_i32_1 = arith.constant 0 : i32
    return %c0_i32, %c0_i32_0 : i32, i32
  }
  func.func @transform_3(%arg0: i32) -> (i32, i32) {
    %c0_i32 = arith.constant 0 : i32
    %c0_i32_0 = arith.constant 0 : i32
    %c0_i32_1 = arith.constant 0 : i32
    return %c0_i32, %c0_i32_0 : i32, i32
  }
  func.func @transform_4(%arg0: i32) -> (i32, i32) {
    %c0_i32 = arith.constant 0 : i32
    %c0_i32_0 = arith.constant 0 : i32
    %c0_i32_1 = arith.constant 0 : i32
    return %c0_i32, %c0_i32_0 : i32, i32
  }
  func.func @transform_5(%arg0: i32) -> (i32, i32) {
    %c0_i32 = arith.constant 0 : i32
    %c0_i32_0 = arith.constant 0 : i32
    %c0_i32_1 = arith.constant 0 : i32
    return %c0_i32, %c0_i32_0 : i32, i32
  }
  func.func @transform_6(%arg0: i32) -> (i32, i32) {
    %c0_i32 = arith.constant 0 : i32
    %c0_i32_0 = arith.constant 0 : i32
    %c0_i32_1 = arith.constant 0 : i32
    return %c0_i32, %c0_i32_0 : i32, i32
  }
  func.func @transform_7(%arg0: i32) -> (i32, i32) {
    %c0_i32 = arith.constant 0 : i32
    %c0_i32_0 = arith.constant 0 : i32
    %c0_i32_1 = arith.constant 0 : i32
    return %c0_i32, %c0_i32_0 : i32, i32
  }
  func.func @transform_8(%arg0: i32) -> (i32, i32) {
    %c0_i32 = arith.constant 0 : i32
    %c0_i32_0 = arith.constant 0 : i32
    %c0_i32_1 = arith.constant 0 : i32
    return %c0_i32, %c0_i32_0 : i32, i32
  }
  func.func @transform_9(%arg0: i32) -> (i32, i32) {
    %c0_i32 = arith.constant 0 : i32
    %c0_i32_0 = arith.constant 0 : i32
    %c0_i32_1 = arith.constant 0 : i32
    return %c0_i32, %c0_i32_0 : i32, i32
  }
  func.func @transform_10(%arg0: i32) -> (i32, i32) {
    %c0_i32 = arith.constant 0 : i32
    %c0_i32_0 = arith.constant 0 : i32
    return %arg0, %c0_i32 : i32, i32
  }
}

</mosaic_0001>

<llo_original>
// kernel: tpu_custom_call.1
$region0: #{tpu_custom_call.1}
  #allocation0 [shape = 'u32[]', space=smem, size = 0x4, offset = 0x4, fixed_abs, tag = 'smem constant byte address 0x4 - core index']
  #allocation1 [shape = 'u32[144,128]{1,0:T(1,128)}', space=vmem, size = 0x12000, scoped, tag = 'internal scratch']
  %s0 = inlined_call_operand.vmem [shape: bf16[512,32], index: 0, kind: input, shape index: {}]
  %s1 = inlined_call_operand.vmem [shape: s8[512,32], index: 1, kind: input, shape index: {}]
  %s2 = inlined_call_operand.vmem [shape: bf16[32,32], index: 2, kind: input, shape index: {}]
  %s3 = inlined_call_operand.vmem [shape: f32[1,32], index: 3, kind: input, shape index: {}]
  %s4 = inlined_call_operand.vmem [shape: bf16[32,8], index: 4, kind: input, shape index: {}]
  %s5 = inlined_call_operand.vmem [shape: f32[1,8], index: 5, kind: input, shape index: {}]
  %s6 = inlined_call_operand.vmem [shape: bf16[8,32], index: 6, kind: input, shape index: {}]
  %s7 = inlined_call_operand.vmem [shape: f32[1,32], index: 7, kind: input, shape index: {}]
  %s8 = inlined_call_operand.vmem [shape: bf16[32,128], index: 8, kind: input, shape index: {}]
  %s9 = inlined_call_operand.vmem [shape: f32[1,128], index: 9, kind: input, shape index: {}]
  %s10 = inlined_call_operand.hbm [shape: f32[512,128], index: 10, kind: output, shape index: {}]
  %s11 = sld [smem:[#allocation0]]
  $region73: #{tpu_custom_call.1} parent=0
    _
  %s13 = ssub.s32 1, %s11
  %s14 = scalar_select 0, %s13, %s11
  $region1: #{tpu_custom_call.1} parent=0
    #allocation2 [shape = 'u8[262144]{0}', space=vmem, size = 0x40000, scoped, tag = 'output window, operand 0']
    #allocation3 [shape = 's32[2]{0}', space=sflag, size = 0x8, scoped, tag = 'scoped memory for tpu_custom_call.1']
    %15 = vsyncpa [#allocation3], 0
    %s16 = scalar_lea.sflag [#allocation3], 1
    %17 = vsyncpa %s16, 0
    loop: start=0, step=1, limit=4
    $region2: #{tpu_custom_call.1} parent=1 // loop_pre_header
      _
    $region3: #{tpu_custom_call.1} parent=1 // loop_header
      %s19 = sphi 0, %s23
      %p20 = scmp.ge.s32.totalorder %s19, 4
      %s29 = sphi 0, %s31
      %s32 = sphi 0, %s29
      %s33 = sphi 0, %s32
      %s49 = sphi 0, %s33
      %s55 = sphi 0, %s57
      %s58 = sphi 0, %s55
      %s59 = sphi 0, %s58
      %s75 = sphi 0, %s59
      %s79 = sphi 0, %s79
      %s81 = sphi 0, %s79
      %s82 = sphi 0, %s81
      %s96 = sphi 0, %s82
      %s100 = sphi 0, %s100
      %s102 = sphi 0, %s100
      %s103 = sphi 0, %s102
      %s117 = sphi 0, %s103
      %s121 = sphi 0, %s121
      %s123 = sphi 0, %s121
      %s124 = sphi 0, %s123
      %s138 = sphi 0, %s124
      %s142 = sphi 0, %s142
      %s144 = sphi 0, %s142
      %s145 = sphi 0, %s144
      %s159 = sphi 0, %s145
      %s163 = sphi 0, %s163
      %s165 = sphi 0, %s163
      %s166 = sphi 0, %s165
      %s180 = sphi 0, %s166
      %s184 = sphi 0, %s184
      %s186 = sphi 0, %s184
      %s187 = sphi 0, %s186
      %s201 = sphi 0, %s187
      %s205 = sphi 0, %s205
      %s207 = sphi 0, %s205
      %s208 = sphi 0, %s207
      %s222 = sphi 0, %s208
      %s226 = sphi 0, %s226
      %s228 = sphi 0, %s226
      %s229 = sphi 0, %s228
      %s243 = sphi 0, %s229
      %s249 = sphi 0, %s251
      %s252 = sphi 0, %s249
      %s253 = sphi 0, %s252
      %s269 = sphi 0, %s253
    $region4: #{tpu_custom_call.1} parent=1 // loop_header_branch
      %22 = sbr.rel (%p20) target = $region8
    $region5: #{tpu_custom_call.1} parent=1 // loop_body
      %s24 = ssub.s32 %s19, 1
      %s25 = ssub.s32 %s19, 2
      %s26 = sadd.s32 %s19, 1
      %s27 = ssub.s32 %s19, %s26
      %p28 = scmp.eq.s32.totalorder %s27, 0
      %s30 = sadd.s32 %s29, 1
      %s31 = scalar_select %p28, %s29, %s30
      %p34 = pneg %p28
      %p35 = scmp.eq.s32.totalorder %s19, 1
      %p36 = por %p34, %p35
      %p37 = scmp.ne.s32.totalorder %s29, %s32
      %p38 = scmp.eq.s32.totalorder %s19, 0
      %p39 = por %p37, %p38
      %p40 = scmp.ne.s32.totalorder %s29, %s32
      %p41 = scmp.eq.s32.totalorder %s24, 1
      %p42 = por %p40, %p41
      %p43 = scmp.ne.s32.totalorder %s32, %s33
      %p44 = scmp.eq.s32.totalorder %s24, 0
      %p45 = por %p43, %p44
      %p46 = scmp.ne.s32.totalorder %s32, %s33
      %p47 = scmp.eq.s32.totalorder %s25, 1
      %p48 = por %p46, %p47
      %p50 = scmp.ne.s32.totalorder %s33, %s49
      %p51 = scmp.eq.s32.totalorder %s25, 0
      %p52 = por %p50, %p51
      %s53 = ssub.s32 %s19, %s26
      %p54 = scmp.eq.s32.totalorder %s53, 0
      %s56 = sadd.s32 %s55, 1
      %s57 = scalar_select %p54, %s55, %s56
      %p60 = pneg %p54
      %p61 = scmp.eq.s32.totalorder %s19, 1
      %p62 = por %p60, %p61
      %p63 = scmp.ne.s32.totalorder %s55, %s58
      %p64 = scmp.eq.s32.totalorder %s19, 0
      %p65 = por %p63, %p64
      %p66 = scmp.ne.s32.totalorder %s55, %s58
      %p67 = scmp.eq.s32.totalorder %s24, 1
      %p68 = por %p66, %p67
      %p69 = scmp.ne.s32.totalorder %s58, %s59
      %p70 = scmp.eq.s32.totalorder %s24, 0
      %p71 = por %p69, %p70
      %p72 = scmp.ne.s32.totalorder %s58, %s59
      %p73 = scmp.eq.s32.totalorder %s25, 1
      %p74 = por %p72, %p73
      %p76 = scmp.ne.s32.totalorder %s59, %s75
      %p77 = scmp.eq.s32.totalorder %s25, 0
      %p78 = por %p76, %p77
      %s80 = sadd.s32 %s79, 1
      %p83 = scmp.eq.s32.totalorder %s19, 1
      %p84 = scmp.ne.s32.totalorder %s79, %s81
      %p85 = scmp.eq.s32.totalorder %s19, 0
      %p86 = por %p84, %p85
      %p87 = scmp.ne.s32.totalorder %s79, %s81
      %p88 = scmp.eq.s32.totalorder %s24, 1
      %p89 = por %p87, %p88
      %p90 = scmp.ne.s32.totalorder %s81, %s82
      %p91 = scmp.eq.s32.totalorder %s24, 0
      %p92 = por %p90, %p91
      %p93 = scmp.ne.s32.totalorder %s81, %s82
      %p94 = scmp.eq.s32.totalorder %s25, 1
      %p95 = por %p93, %p94
      %p97 = scmp.ne.s32.totalorder %s82, %s96
      %p98 = scmp.eq.s32.totalorder %s25, 0
      %p99 = por %p97, %p98
      %s101 = sadd.s32 %s100, 1
      %p104 = scmp.eq.s32.totalorder %s19, 1
      %p105 = scmp.ne.s32.totalorder %s100, %s102
      %p106 = scmp.eq.s32.totalorder %s19, 0
      %p107 = por %p105, %p106
      %p108 = scmp.ne.s32.totalorder %s100, %s102
      %p109 = scmp.eq.s32.totalorder %s24, 1
      %p110 = por %p108, %p109
      %p111 = scmp.ne.s32.totalorder %s102, %s103
      %p112 = scmp.eq.s32.totalorder %s24, 0
      %p113 = por %p111, %p112
      %p114 = scmp.ne.s32.totalorder %s102, %s103
      %p115 = scmp.eq.s32.totalorder %s25, 1
      %p116 = por %p114, %p115
      %p118 = scmp.ne.s32.totalorder %s103, %s117
      %p119 = scmp.eq.s32.totalorder %s25, 0
      %p120 = por %p118, %p119
      %s122 = sadd.s32 %s121, 1
      %p125 = scmp.eq.s32.totalorder %s19, 1
      %p126 = scmp.ne.s32.totalorder %s121, %s123
      %p127 = scmp.eq.s32.totalorder %s19, 0
      %p128 = por %p126, %p127
      %p129 = scmp.ne.s32.totalorder %s121, %s123
      %p130 = scmp.eq.s32.totalorder %s24, 1
      %p131 = por %p129, %p130
      %p132 = scmp.ne.s32.totalorder %s123, %s124
      %p133 = scmp.eq.s32.totalorder %s24, 0
      %p134 = por %p132, %p133
      %p135 = scmp.ne.s32.totalorder %s123, %s124
      %p136 = scmp.eq.s32.totalorder %s25, 1
      %p137 = por %p135, %p136
      %p139 = scmp.ne.s32.totalorder %s124, %s138
      %p140 = scmp.eq.s32.totalorder %s25, 0
      %p141 = por %p139, %p140
      %s143 = sadd.s32 %s142, 1
      %p146 = scmp.eq.s32.totalorder %s19, 1
      %p147 = scmp.ne.s32.totalorder %s142, %s144
      %p148 = scmp.eq.s32.totalorder %s19, 0
      %p149 = por %p147, %p148
      %p150 = scmp.ne.s32.totalorder %s142, %s144
      %p151 = scmp.eq.s32.totalorder %s24, 1
      %p152 = por %p150, %p151
      %p153 = scmp.ne.s32.totalorder %s144, %s145
      %p154 = scmp.eq.s32.totalorder %s24, 0
      %p155 = por %p153, %p154
      %p156 = scmp.ne.s32.totalorder %s144, %s145
      %p157 = scmp.eq.s32.totalorder %s25, 1
      %p158 = por %p156, %p157
      %p160 = scmp.ne.s32.totalorder %s145, %s159
      %p161 = scmp.eq.s32.totalorder %s25, 0
      %p162 = por %p160, %p161
      %s164 = sadd.s32 %s163, 1
      %p167 = scmp.eq.s32.totalorder %s19, 1
      %p168 = scmp.ne.s32.totalorder %s163, %s165
      %p169 = scmp.eq.s32.totalorder %s19, 0
      %p170 = por %p168, %p169
      %p171 = scmp.ne.s32.totalorder %s163, %s165
      %p172 = scmp.eq.s32.totalorder %s24, 1
      %p173 = por %p171, %p172
      %p174 = scmp.ne.s32.totalorder %s165, %s166
      %p175 = scmp.eq.s32.totalorder %s24, 0
      %p176 = por %p174, %p175
      %p177 = scmp.ne.s32.totalorder %s165, %s166
      %p178 = scmp.eq.s32.totalorder %s25, 1
      %p179 = por %p177, %p178
      %p181 = scmp.ne.s32.totalorder %s166, %s180
      %p182 = scmp.eq.s32.totalorder %s25, 0
      %p183 = por %p181, %p182
      %s185 = sadd.s32 %s184, 1
      %p188 = scmp.eq.s32.totalorder %s19, 1
      %p189 = scmp.ne.s32.totalorder %s184, %s186
      %p190 = scmp.eq.s32.totalorder %s19, 0
      %p191 = por %p189, %p190
      %p192 = scmp.ne.s32.totalorder %s184, %s186
      %p193 = scmp.eq.s32.totalorder %s24, 1
      %p194 = por %p192, %p193
      %p195 = scmp.ne.s32.totalorder %s186, %s187
      %p196 = scmp.eq.s32.totalorder %s24, 0
      %p197 = por %p195, %p196
      %p198 = scmp.ne.s32.totalorder %s186, %s187
      %p199 = scmp.eq.s32.totalorder %s25, 1
      %p200 = por %p198, %p199
      %p202 = scmp.ne.s32.totalorder %s187, %s201
      %p203 = scmp.eq.s32.totalorder %s25, 0
      %p204 = por %p202, %p203
      %s206 = sadd.s32 %s205, 1
      %p209 = scmp.eq.s32.totalorder %s19, 1
      %p210 = scmp.ne.s32.totalorder %s205, %s207
      %p211 = scmp.eq.s32.totalorder %s19, 0
      %p212 = por %p210, %p211
      %p213 = scmp.ne.s32.totalorder %s205, %s207
      %p214 = scmp.eq.s32.totalorder %s24, 1
      %p215 = por %p213, %p214
      %p216 = scmp.ne.s32.totalorder %s207, %s208
      %p217 = scmp.eq.s32.totalorder %s24, 0
      %p218 = por %p216, %p217
      %p219 = scmp.ne.s32.totalorder %s207, %s208
      %p220 = scmp.eq.s32.totalorder %s25, 1
      %p221 = por %p219, %p220
      %p223 = scmp.ne.s32.totalorder %s208, %s222
      %p224 = scmp.eq.s32.totalorder %s25, 0
      %p225 = por %p223, %p224
      %s227 = sadd.s32 %s226, 1
      %p230 = scmp.eq.s32.totalorder %s19, 1
      %p231 = scmp.ne.s32.totalorder %s226, %s228
      %p232 = scmp.eq.s32.totalorder %s19, 0
      %p233 = por %p231, %p232
      %p234 = scmp.ne.s32.totalorder %s226, %s228
      %p235 = scmp.eq.s32.totalorder %s24, 1
      %p236 = por %p234, %p235
      %p237 = scmp.ne.s32.totalorder %s228, %s229
      %p238 = scmp.eq.s32.totalorder %s24, 0
      %p239 = por %p237, %p238
      %p240 = scmp.ne.s32.totalorder %s228, %s229
      %p241 = scmp.eq.s32.totalorder %s25, 1
      %p242 = por %p240, %p241
      %p244 = scmp.ne.s32.totalorder %s229, %s243
      %p245 = scmp.eq.s32.totalorder %s25, 0
      %p246 = por %p244, %p245
      %s247 = ssub.s32 %s19, %s26
      %p248 = scmp.eq.s32.totalorder %s247, 0
      %s250 = sadd.s32 %s249, 1
      %s251 = scalar_select %p248, %s249, %s250
      %p254 = pneg %p248
      %p255 = scmp.eq.s32.totalorder %s19, 1
      %p256 = por %p254, %p255
      %p257 = scmp.ne.s32.totalorder %s249, %s252
      %p258 = scmp.eq.s32.totalorder %s19, 0
      %p259 = por %p257, %p258
      %p260 = scmp.ne.s32.totalorder %s249, %s252
      %p261 = scmp.eq.s32.totalorder %s24, 1
      %p262 = por %p260, %p261
      %p263 = scmp.ne.s32.totalorder %s252, %s253
      %p264 = scmp.eq.s32.totalorder %s24, 0
      %p265 = por %p263, %p264
      %p266 = scmp.ne.s32.totalorder %s252, %s253
      %p267 = scmp.eq.s32.totalorder %s25, 1
      %p268 = por %p266, %p267
      %p270 = scmp.ne.s32.totalorder %s253, %s269
      %p271 = scmp.eq.s32.totalorder %s25, 0
      %p272 = por %p270, %p271
      %p273 = scmp.le.s32.totalorder 1, %s19
      %p274 = scmp.lt.s32.totalorder %s19, 3
      %p275 = pnand %p273, %p274
      %p276 = pneg %p275
      // Predicated region
      $region9: #{tpu_custom_call.1} parent=5 // pred_check
        _
      $region10: #{tpu_custom_call.1} parent=5 // pred_check_branch
        %278 = sbr.rel (%p275) target = $region12
      $region11: #{tpu_custom_call.1} parent=5 // pred_region
        %s279 = ssub.s32 %s19, 1
        // Predicated region
        $region13: #{tpu_custom_call.1} parent=11 // pred_check
          %p280 = pneg %p92
        $region14: #{tpu_custom_call.1} parent=11 // pred_check_branch
          %282 = sbr.rel (%p280) target = $region16
        $region15: #{tpu_custom_call.1} parent=11 // pred_region
          _
        $region16: #{tpu_custom_call.1} parent=11 // pred_fallthru
          _
        // Predicated region
        $region17: #{tpu_custom_call.1} parent=11 // pred_check
          %p283 = pneg %p113
        $region18: #{tpu_custom_call.1} parent=11 // pred_check_branch
          %285 = sbr.rel (%p283) target = $region20
        $region19: #{tpu_custom_call.1} parent=11 // pred_region
          _
        $region20: #{tpu_custom_call.1} parent=11 // pred_fallthru
          _
        // Predicated region
        $region21: #{tpu_custom_call.1} parent=11 // pred_check
          %p286 = pneg %p134
        $region22: #{tpu_custom_call.1} parent=11 // pred_check_branch
          %288 = sbr.rel (%p286) target = $region24
        $region23: #{tpu_custom_call.1} parent=11 // pred_region
          _
        $region24: #{tpu_custom_call.1} parent=11 // pred_fallthru
          _
        // Predicated region
        $region25: #{tpu_custom_call.1} parent=11 // pred_check
          %p289 = pneg %p155
        $region26: #{tpu_custom_call.1} parent=11 // pred_check_branch
          %291 = sbr.rel (%p289) target = $region28
        $region27: #{tpu_custom_call.1} parent=11 // pred_region
          _
        $region28: #{tpu_custom_call.1} parent=11 // pred_fallthru
          _
        // Predicated region
        $region29: #{tpu_custom_call.1} parent=11 // pred_check
          %p292 = pneg %p176
        $region30: #{tpu_custom_call.1} parent=11 // pred_check_branch
          %294 = sbr.rel (%p292) target = $region32
        $region31: #{tpu_custom_call.1} parent=11 // pred_region
          _
        $region32: #{tpu_custom_call.1} parent=11 // pred_fallthru
          _
        // Predicated region
        $region33: #{tpu_custom_call.1} parent=11 // pred_check
          %p295 = pneg %p197
        $region34: #{tpu_custom_call.1} parent=11 // pred_check_branch
          %297 = sbr.rel (%p295) target = $region36
        $region35: #{tpu_custom_call.1} parent=11 // pred_region
          _
        $region36: #{tpu_custom_call.1} parent=11 // pred_fallthru
          _
        // Predicated region
        $region37: #{tpu_custom_call.1} parent=11 // pred_check
          %p298 = pneg %p218
        $region38: #{tpu_custom_call.1} parent=11 // pred_check_branch
          %300 = sbr.rel (%p298) target = $region40
        $region39: #{tpu_custom_call.1} parent=11 // pred_region
          _
        $region40: #{tpu_custom_call.1} parent=11 // pred_fallthru
          _
        // Predicated region
        $region41: #{tpu_custom_call.1} parent=11 // pred_check
          %p301 = pneg %p239
        $region42: #{tpu_custom_call.1} parent=11 // pred_check_branch
          %303 = sbr.rel (%p301) target = $region44
        $region43: #{tpu_custom_call.1} parent=11 // pred_region
          _
        $region44: #{tpu_custom_call.1} parent=11 // pred_fallthru
          _
      $region12: #{tpu_custom_call.1} parent=5 // pred_fallthru
        _
      %p304 = scmp.lt.s32.totalorder %s19, 2
      // Predicated region
      $region45: #{tpu_custom_call.1} parent=5 // pred_check
        %p305 = pneg %p304
      $region46: #{tpu_custom_call.1} parent=5 // pred_check_branch
        %307 = sbr.rel (%p305) target = $region48
      $region47: #{tpu_custom_call.1} parent=5 // pred_region
        // Predicated region
        $region49: #{tpu_custom_call.1} parent=47 // pred_check
          %p308 = pneg %p39
        $region50: #{tpu_custom_call.1} parent=47 // pred_check_branch
          %310 = sbr.rel (%p308) target = $region52
        $region51: #{tpu_custom_call.1} parent=47 // pred_region
          %s311 = smul.u32 32, %s19
          %p312 = scmp.lt.s32.totalorder %s311, 63
          %s313 = scalar_select %p312, %s311, 63
          %s314 = smul.addr %s313, 4
          %s315 = scalar_lea.vmem %s0, %s314
          %s316 = smul.u32 32, %s19
        $region52: #{tpu_custom_call.1} parent=47 // pred_fallthru
          _
        // Predicated region
        $region53: #{tpu_custom_call.1} parent=47 // pred_check
          %p317 = pneg %p65
        $region54: #{tpu_custom_call.1} parent=47 // pred_check_branch
          %319 = sbr.rel (%p317) target = $region56
        $region55: #{tpu_custom_call.1} parent=47 // pred_region
          %s320 = smul.u32 8, %s19
          %p321 = scmp.lt.s32.totalorder %s320, 15
          %s322 = scalar_select %p321, %s320, 15
          %s323 = smul.addr %s322, 8
          %s324 = scalar_lea.vmem %s1, %s323
          %s325 = smul.u32 8, %s19
        $region56: #{tpu_custom_call.1} parent=47 // pred_fallthru
          _
      $region48: #{tpu_custom_call.1} parent=5 // pred_fallthru
        _
      %p326 = scmp.le.s32.totalorder 1, %s19
      %p327 = scmp.lt.s32.totalorder %s19, 3
      %p328 = pnand %p326, %p327
      %p329 = pneg %p328
      // Predicated region
      $region57: #{tpu_custom_call.1} parent=5 // pred_check
        _
      $region58: #{tpu_custom_call.1} parent=5 // pred_check_branch
        %331 = sbr.rel (%p328) target = $region60
      $region59: #{tpu_custom_call.1} parent=5 // pred_region
        %s332 = ssub.s32 %s19, 1
        %s333 = smul.u32 32, %s24
        %p334 = scmp.lt.s32.totalorder %s333, 63
        %s335 = scalar_select %p334, %s333, 63
        %s336 = smul.addr %s335, 4
        %s337 = scalar_lea.vmem %s0, %s336
        %p338 = pneg %p45
        %p339 = pneg %p42
        %s340 = smul.u32 8, %s24
        %p341 = scmp.lt.s32.totalorder %s340, 15
        %s342 = scalar_select %p341, %s340, 15
        %s343 = smul.addr %s342, 8
        %s344 = scalar_lea.vmem %s1, %s343
        %p345 = pneg %p71
        %p346 = pneg %p68
        %p347 = pneg %p92
        %p348 = pneg %p89
        %p349 = pneg %p113
        %p350 = pneg %p110
        %p351 = pneg %p134
        %p352 = pneg %p131
        %p353 = pneg %p155
        %p354 = pneg %p152
        %p355 = pneg %p176
        %p356 = pneg %p173
        %p357 = pneg %p197
        %p358 = pneg %p194
        %p359 = pneg %p218
        %p360 = pneg %p215
        %p361 = pneg %p239
        %p362 = pneg %p236
        %p363 = pneg %p265
        %p364 = pneg %p262
        %s365 = sand.u32 %s252, 1
        %s366 = scalar_lea.sflag [#allocation3], %s365
        %s367 = sand.u32 %s252, 1
        %s368 = smul.addr %s367, 256
        %s369 = scalar_lea.vmem [#allocation2], %s368
        %s370 = smul.u32 32, %s24
        %p371 = scmp.lt.s32.totalorder %s370, 63
        %s372 = scalar_select %p371, %s370, 63
        %s373 = smul.addr %s372, 4
        %s374 = scalar_lea.vmem %s0, %s373
        %s375 = smul.u32 32, %s24
        %s376 = smul.u32 8, %s24
        %p377 = scmp.lt.s32.totalorder %s376, 15
        %s378 = scalar_select %p377, %s376, 15
        %s379 = smul.addr %s378, 8
        %s380 = scalar_lea.vmem %s1, %s379
        %s381 = smul.u32 8, %s24
        %s382 = smul.u32 32, %s24
        %v384 = vld [vmem:[%s374] sm:$0xf]
        %v385 = vld [vmem:[%s374 + $0x4] sm:$0xf]
        %v386 = vld [vmem:[%s374 + $0x8] sm:$0xf]
        %v387 = vld [vmem:[%s374 + $0xc] sm:$0xf]
        %v388 = vld [vmem:[%s374 + $0x10] sm:$0xf]
        %v389 = vld [vmem:[%s374 + $0x14] sm:$0xf]
        %v390 = vld [vmem:[%s374 + $0x18] sm:$0xf]
        %v391 = vld [vmem:[%s374 + $0x1c] sm:$0xf]
        %v392 = vld [vmem:[%s374 + $0x20] sm:$0xf]
        %v393 = vld [vmem:[%s374 + $0x24] sm:$0xf]
        %v394 = vld [vmem:[%s374 + $0x28] sm:$0xf]
        %v395 = vld [vmem:[%s374 + $0x2c] sm:$0xf]
        %v396 = vld [vmem:[%s374 + $0x30] sm:$0xf]
        %v397 = vld [vmem:[%s374 + $0x34] sm:$0xf]
        %v398 = vld [vmem:[%s374 + $0x38] sm:$0xf]
        %v399 = vld [vmem:[%s374 + $0x3c] sm:$0xf]
        %v400 = vld [vmem:[%s374 + $0x40] sm:$0xf]
        %v401 = vld [vmem:[%s374 + $0x44] sm:$0xf]
        %v402 = vld [vmem:[%s374 + $0x48] sm:$0xf]
        %v403 = vld [vmem:[%s374 + $0x4c] sm:$0xf]
        %v404 = vld [vmem:[%s374 + $0x50] sm:$0xf]
        %v405 = vld [vmem:[%s374 + $0x54] sm:$0xf]
        %v406 = vld [vmem:[%s374 + $0x58] sm:$0xf]
        %v407 = vld [vmem:[%s374 + $0x5c] sm:$0xf]
        %v408 = vld [vmem:[%s374 + $0x60] sm:$0xf]
        %v409 = vld [vmem:[%s374 + $0x64] sm:$0xf]
        %v410 = vld [vmem:[%s374 + $0x68] sm:$0xf]
        %v411 = vld [vmem:[%s374 + $0x6c] sm:$0xf]
        %v412 = vld [vmem:[%s374 + $0x70] sm:$0xf]
        %v413 = vld [vmem:[%s374 + $0x74] sm:$0xf]
        %v414 = vld [vmem:[%s374 + $0x78] sm:$0xf]
        %v415 = vld [vmem:[%s374 + $0x7c] sm:$0xf]
        %v416 = vld [vmem:[%s380] sm:$0xff]
        %v417 = vld [vmem:[%s380 + $0x8] sm:$0xff]
        %v418 = vld [vmem:[%s380 + $0x10] sm:$0xff]
        %v419 = vld [vmem:[%s380 + $0x18] sm:$0xff]
        %v420 = vld [vmem:[%s380 + $0x20] sm:$0xff]
        %v421 = vld [vmem:[%s380 + $0x28] sm:$0xff]
        %v422 = vld [vmem:[%s380 + $0x30] sm:$0xff]
        %v423 = vld [vmem:[%s380 + $0x38] sm:$0xff]
        %v424 = vunpack.c.0.s8 %v416
        %v425 = vunpack.c.1.s8 %v416
        %v426 = vunpack.c.2.s8 %v416
        %v427 = vunpack.c.3.s8 %v416
        %v428 = vunpack.c.0.s8 %v417
        %v429 = vunpack.c.1.s8 %v417
        %v430 = vunpack.c.2.s8 %v417
        %v431 = vunpack.c.3.s8 %v417
        %v432 = vunpack.c.0.s8 %v418
        %v433 = vunpack.c.1.s8 %v418
        %v434 = vunpack.c.2.s8 %v418
        %v435 = vunpack.c.3.s8 %v418
        %v436 = vunpack.c.0.s8 %v419
        %v437 = vunpack.c.1.s8 %v419
        %v438 = vunpack.c.2.s8 %v419
        %v439 = vunpack.c.3.s8 %v419
        %v440 = vunpack.c.0.s8 %v420
        %v441 = vunpack.c.1.s8 %v420
        %v442 = vunpack.c.2.s8 %v420
        %v443 = vunpack.c.3.s8 %v420
        %v444 = vunpack.c.0.s8 %v421
        %v445 = vunpack.c.1.s8 %v421
        %v446 = vunpack.c.2.s8 %v421
        %v447 = vunpack.c.3.s8 %v421
        %v448 = vunpack.c.0.s8 %v422
        %v449 = vunpack.c.1.s8 %v422
        %v450 = vunpack.c.2.s8 %v422
        %v451 = vunpack.c.3.s8 %v422
        %v452 = vunpack.c.0.s8 %v423
        %v453 = vunpack.c.1.s8 %v423
        %v454 = vunpack.c.2.s8 %v423
        %v455 = vunpack.c.3.s8 %v423
        %v456 = vld [vmem:[%s2] sm:$0xf]
        %v457 = vld [vmem:[%s2 + $0x4] sm:$0xf]
        %v458 = vld [vmem:[%s2 + $0x8] sm:$0xf]
        %v459 = vld [vmem:[%s2 + $0xc] sm:$0xf]
        %v460 = vld [vmem:[%s3] sm:$0x1]
        %v462 = vlaneseq
        %v463 = vshrl.u32 %v462, 7
        %v464 = vsub.s32 0, %v463
        %v465 = vrot.slane %v460, %v464
        %v499 = vunpack.c.l.b16 %v384
        %v500 = vunpack.c.l.b16 %v385
        %v501 = vunpack.c.l.b16 %v386
        %v502 = vunpack.c.l.b16 %v387
        %v503 = vunpack.c.l.b16 %v388
        %v504 = vunpack.c.l.b16 %v389
        %v505 = vunpack.c.l.b16 %v390
        %v506 = vunpack.c.l.b16 %v391
        %v507 = vunpack.c.l.b16 %v392
        %v508 = vunpack.c.l.b16 %v393
        %v509 = vunpack.c.l.b16 %v394
        %v510 = vunpack.c.l.b16 %v395
        %v511 = vunpack.c.l.b16 %v396
        %v512 = vunpack.c.l.b16 %v397
        %v513 = vunpack.c.l.b16 %v398
        %v514 = vunpack.c.l.b16 %v399
        %v515 = vunpack.c.l.b16 %v400
        %v516 = vunpack.c.l.b16 %v401
        %v517 = vunpack.c.l.b16 %v402
        %v518 = vunpack.c.l.b16 %v403
        %v519 = vunpack.c.l.b16 %v404
        %v520 = vunpack.c.l.b16 %v405
        %v521 = vunpack.c.l.b16 %v406
        %v522 = vunpack.c.l.b16 %v407
        %v523 = vunpack.c.l.b16 %v408
        %v524 = vunpack.c.l.b16 %v409
        %v525 = vunpack.c.l.b16 %v410
        %v526 = vunpack.c.l.b16 %v411
        %v527 = vunpack.c.l.b16 %v412
        %v528 = vunpack.c.l.b16 %v413
        %v529 = vunpack.c.l.b16 %v414
        %v530 = vunpack.c.l.b16 %v415
        %v531 = vpack.c.b16 %v500, %v499
        %v532 = vpack.c.b16 %v502, %v501
        %v533 = vpack.c.b16 %v504, %v503
        %v534 = vpack.c.b16 %v506, %v505
        %v535 = vpack.c.b16 %v508, %v507
        %v536 = vpack.c.b16 %v510, %v509
        %v537 = vpack.c.b16 %v512, %v511
        %v538 = vpack.c.b16 %v514, %v513
        %v539 = vpack.c.b16 %v516, %v515
        %v540 = vpack.c.b16 %v518, %v517
        %v541 = vpack.c.b16 %v520, %v519
        %v542 = vpack.c.b16 %v522, %v521
        %v543 = vpack.c.b16 %v524, %v523
        %v544 = vpack.c.b16 %v526, %v525
        %v545 = vpack.c.b16 %v528, %v527
        %v546 = vpack.c.b16 %v530, %v529
        %v551 = vunpack.c.l.b16 %v456
        %v552 = vunpack.c.l.b16 %v457
        %v553 = vunpack.c.l.b16 %v458
        %v554 = vunpack.c.l.b16 %v459
        %v555 = vpack.c.b16 %v552, %v551
        %v556 = vpack.c.b16 %v554, %v553
        %vm559 = vcmask 261120
        %v561 = vsel %vm559, %v531, 0
        %v564 = vsel %vm559, %v532, 0
        %v567 = vsel %vm559, %v533, 0
        %v570 = vsel %vm559, %v534, 0
        %v573 = vsel %vm559, %v535, 0
        %v576 = vsel %vm559, %v536, 0
        %v579 = vsel %vm559, %v537, 0
        %v582 = vsel %vm559, %v538, 0
        %v585 = vsel %vm559, %v539, 0
        %v588 = vsel %vm559, %v540, 0
        %v591 = vsel %vm559, %v541, 0
        %v594 = vsel %vm559, %v542, 0
        %v597 = vsel %vm559, %v543, 0
        %v600 = vsel %vm559, %v544, 0
        %v603 = vsel %vm559, %v545, 0
        %v606 = vsel %vm559, %v546, 0
        %608 = vmatprep.subr.bf16.mxu0 0
        %609 = vmatpush1.bf16.msra.mxu0 0
        %610 = vmatprep.subr.bf16.mxu0 0
        %611 = vmatpush1.bf16.msra.mxu0 0
        %612 = vmatprep.subr.bf16.mxu0 0
        %613 = vmatpush1.bf16.msra.mxu0 0
        %614 = vmatprep.subr.bf16.mxu0 0
        %615 = vmatpush1.bf16.msra.mxu0 0
        %616 = vmatprep.subr.bf16.mxu0 0
        %617 = vmatpush1.bf16.msra.mxu0 0
        %618 = vmatprep.subr.bf16.mxu0 0
        %619 = vmatpush1.bf16.msra.mxu0 0
        %620 = vmatprep.subr.bf16.mxu0 0
        %621 = vmatpush1.bf16.msra.mxu0 %v556
        %622 = vmatprep.subr.bf16.mxu0 0
        %623 = vmatpush1.bf16.msra.mxu0 %v555
        %624 = vmatprep.subr.bf16.mxu0 0
        %625 = vmatpush2.bf16.msra.mxu0 0
        %626 = vmatprep.subr.bf16.mxu0 0
        %627 = vmatpush2.bf16.msra.mxu0 0
        %628 = vmatprep.subr.bf16.mxu0 0
        %629 = vmatpush2.bf16.msra.mxu0 0
        %630 = vmatprep.subr.bf16.mxu0 0
        %631 = vmatpush2.bf16.msra.mxu0 0
        %632 = vmatprep.subr.bf16.mxu0 0
        %633 = vmatpush2.bf16.msra.mxu0 0
        %634 = vmatprep.subr.bf16.mxu0 0
        %635 = vmatpush2.bf16.msra.mxu0 0
        %636 = vmatprep.subr.bf16.mxu0 0
        %637 = vmatpush2.bf16.msra.mxu0 0
        %638 = vmatprep.subr.bf16.mxu0 0
        %639 = vmatpush2.bf16.msra.mxu0 0
        %640 = vmatprep.mubr.bf16.mxu0 0
        %641 = vmatmul.mubr.bf16.gmra.mxu0 %v561
        %v642 = vpop.f32.mrf.mxu0
        %v643 = vadd.f32 %v465, %v642
        %v644 = vpop.f32.mrf.mxu0
        %v645 = vpop.f32.mrf.mxu0
        %v646 = vadd.f32 %v465, %v645
        %v647 = vpop.f32.mrf.mxu0
        %648 = vmatprep.mubr.bf16.mxu0 0
        %649 = vmatmul.mubr.bf16.gmra.mxu0 %v564
        %v650 = vpop.f32.mrf.mxu0
        %v651 = vadd.f32 %v465, %v650
        %v652 = vpop.f32.mrf.mxu0
        %v653 = vpop.f32.mrf.mxu0
        %v654 = vadd.f32 %v465, %v653
        %v655 = vpop.f32.mrf.mxu0
        %656 = vmatprep.mubr.bf16.mxu0 0
        %657 = vmatmul.mubr.bf16.gmra.mxu0 %v567
        %v658 = vpop.f32.mrf.mxu0
        %v659 = vadd.f32 %v465, %v658
        %v660 = vpop.f32.mrf.mxu0
        %v661 = vpop.f32.mrf.mxu0
        %v662 = vadd.f32 %v465, %v661
        %v663 = vpop.f32.mrf.mxu0
        %664 = vmatprep.mubr.bf16.mxu0 0
        %665 = vmatmul.mubr.bf16.gmra.mxu0 %v570
        %v666 = vpop.f32.mrf.mxu0
        %v667 = vadd.f32 %v465, %v666
        %v668 = vpop.f32.mrf.mxu0
        %v669 = vpop.f32.mrf.mxu0
        %v670 = vadd.f32 %v465, %v669
        %v671 = vpop.f32.mrf.mxu0
        %672 = vmatprep.mubr.bf16.mxu0 0
        %673 = vmatmul.mubr.bf16.gmra.mxu0 %v573
        %v674 = vpop.f32.mrf.mxu0
        %v675 = vadd.f32 %v465, %v674
        %v676 = vpop.f32.mrf.mxu0
        %v677 = vpop.f32.mrf.mxu0
        %v678 = vadd.f32 %v465, %v677
        %v679 = vpop.f32.mrf.mxu0
        %680 = vmatprep.mubr.bf16.mxu0 0
        %681 = vmatmul.mubr.bf16.gmra.mxu0 %v576
        %v682 = vpop.f32.mrf.mxu0
        %v683 = vadd.f32 %v465, %v682
        %v684 = vpop.f32.mrf.mxu0
        %v685 = vpop.f32.mrf.mxu0
        %v686 = vadd.f32 %v465, %v685
        %v687 = vpop.f32.mrf.mxu0
        %688 = vmatprep.mubr.bf16.mxu0 0
        %689 = vmatmul.mubr.bf16.gmra.mxu0 %v579
        %v690 = vpop.f32.mrf.mxu0
        %v691 = vadd.f32 %v465, %v690
        %v692 = vpop.f32.mrf.mxu0
        %v693 = vpop.f32.mrf.mxu0
        %v694 = vadd.f32 %v465, %v693
        %v695 = vpop.f32.mrf.mxu0
        %696 = vmatprep.mubr.bf16.mxu0 0
        %697 = vmatmul.mubr.bf16.gmra.mxu0 %v582
        %v698 = vpop.f32.mrf.mxu0
        %v699 = vadd.f32 %v465, %v698
        %v700 = vpop.f32.mrf.mxu0
        %v701 = vpop.f32.mrf.mxu0
        %v702 = vadd.f32 %v465, %v701
        %v703 = vpop.f32.mrf.mxu0
        %704 = vmatprep.mubr.bf16.mxu0 0
        %705 = vmatmul.mubr.bf16.gmra.mxu0 %v585
        %v706 = vpop.f32.mrf.mxu0
        %v707 = vadd.f32 %v465, %v706
        %v708 = vpop.f32.mrf.mxu0
        %v709 = vpop.f32.mrf.mxu0
        %v710 = vadd.f32 %v465, %v709
        %v711 = vpop.f32.mrf.mxu0
        %712 = vmatprep.mubr.bf16.mxu0 0
        %713 = vmatmul.mubr.bf16.gmra.mxu0 %v588
        %v714 = vpop.f32.mrf.mxu0
        %v715 = vadd.f32 %v465, %v714
        %v716 = vpop.f32.mrf.mxu0
        %v717 = vpop.f32.mrf.mxu0
        %v718 = vadd.f32 %v465, %v717
        %v719 = vpop.f32.mrf.mxu0
        %720 = vmatprep.mubr.bf16.mxu0 0
        %721 = vmatmul.mubr.bf16.gmra.mxu0 %v591
        %v722 = vpop.f32.mrf.mxu0
        %v723 = vadd.f32 %v465, %v722
        %v724 = vpop.f32.mrf.mxu0
        %v725 = vpop.f32.mrf.mxu0
        %v726 = vadd.f32 %v465, %v725
        %v727 = vpop.f32.mrf.mxu0
        %728 = vmatprep.mubr.bf16.mxu0 0
        %729 = vmatmul.mubr.bf16.gmra.mxu0 %v594
        %v730 = vpop.f32.mrf.mxu0
        %v731 = vadd.f32 %v465, %v730
        %v732 = vpop.f32.mrf.mxu0
        %v733 = vpop.f32.mrf.mxu0
        %v734 = vadd.f32 %v465, %v733
        %v735 = vpop.f32.mrf.mxu0
        %736 = vmatprep.mubr.bf16.mxu0 0
        %737 = vmatmul.mubr.bf16.gmra.mxu0 %v597
        %v738 = vpop.f32.mrf.mxu0
        %v739 = vadd.f32 %v465, %v738
        %v740 = vpop.f32.mrf.mxu0
        %v741 = vpop.f32.mrf.mxu0
        %v742 = vadd.f32 %v465, %v741
        %v743 = vpop.f32.mrf.mxu0
        %744 = vmatprep.mubr.bf16.mxu0 0
        %745 = vmatmul.mubr.bf16.gmra.mxu0 %v600
        %v746 = vpop.f32.mrf.mxu0
        %v747 = vadd.f32 %v465, %v746
        %v748 = vpop.f32.mrf.mxu0
        %v749 = vpop.f32.mrf.mxu0
        %v750 = vadd.f32 %v465, %v749
        %v751 = vpop.f32.mrf.mxu0
        %752 = vmatprep.mubr.bf16.mxu0 0
        %753 = vmatmul.mubr.bf16.gmra.mxu0 %v603
        %v754 = vpop.f32.mrf.mxu0
        %v755 = vadd.f32 %v465, %v754
        %v756 = vpop.f32.mrf.mxu0
        %v757 = vpop.f32.mrf.mxu0
        %v758 = vadd.f32 %v465, %v757
        %v759 = vpop.f32.mrf.mxu0
        %760 = vmatprep.mubr.bf16.mxu0 0
        %761 = vmatmul.mubr.bf16.gmra.mxu0 %v606
        %v762 = vpop.f32.mrf.mxu0
        %v763 = vadd.f32 %v465, %v762
        %v764 = vpop.f32.mrf.mxu0
        %v765 = vpop.f32.mrf.mxu0
        %v766 = vadd.f32 %v465, %v765
        %v767 = vpop.f32.mrf.mxu0
        %768 = vdwg.mxu0
        %v769 = vld [vmem:[%s4] sm:$0xf]
        %v770 = vld [vmem:[%s4 + $0x4] sm:$0xf]
        %v771 = vld [vmem:[%s4 + $0x8] sm:$0xf]
        %v772 = vld [vmem:[%s4 + $0xc] sm:$0xf]
        %v773 = vld [vmem:[%s5] sm:$0x1]
        %v775 = vlaneseq
        %v776 = vshrl.u32 %v775, 7
        %v777 = vsub.s32 0, %v776
        %v778 = vrot.slane %v773, %v777
        %v784 = vunpack.c.l.b16 %v769
        %v785 = vunpack.c.l.b16 %v770
        %v786 = vunpack.c.l.b16 %v771
        %v787 = vunpack.c.l.b16 %v772
        %v788 = vpack.c.b16 %v785, %v784
        %v789 = vpack.c.b16 %v787, %v786
        %792 = vmatprep.subr.bf16.mxu0 0
        %793 = vmatpush1.bf16.msra.mxu0 0
        %794 = vmatprep.subr.bf16.mxu0 0
        %795 = vmatpush1.bf16.msra.mxu0 0
        %796 = vmatprep.subr.bf16.mxu0 0
        %797 = vmatpush1.bf16.msra.mxu0 0
        %798 = vmatprep.subr.bf16.mxu0 0
        %799 = vmatpush1.bf16.msra.mxu0 0
        %800 = vmatprep.subr.bf16.mxu0 0
        %801 = vmatpush1.bf16.msra.mxu0 0
        %802 = vmatprep.subr.bf16.mxu0 0
        %803 = vmatpush1.bf16.msra.mxu0 0
        %804 = vmatprep.subr.bf16.mxu0 0
        %805 = vmatpush1.bf16.msra.mxu0 %v789
        %806 = vmatprep.subr.bf16.mxu0 0
        %807 = vmatpush1.bf16.msra.mxu0 %v788
        %808 = vmatprep.subr.bf16.mxu0 0
        %809 = vmatpush2.bf16.msra.mxu0 0
        %810 = vmatprep.subr.bf16.mxu0 0
        %811 = vmatpush2.bf16.msra.mxu0 0
        %812 = vmatprep.subr.bf16.mxu0 0
        %813 = vmatpush2.bf16.msra.mxu0 0
        %814 = vmatprep.subr.bf16.mxu0 0
        %815 = vmatpush2.bf16.msra.mxu0 0
        %816 = vmatprep.subr.bf16.mxu0 0
        %817 = vmatpush2.bf16.msra.mxu0 0
        %818 = vmatprep.subr.bf16.mxu0 0
        %819 = vmatpush2.bf16.msra.mxu0 0
        %820 = vmatprep.subr.bf16.mxu0 0
        %821 = vmatpush2.bf16.msra.mxu0 0
        %822 = vmatprep.subr.bf16.mxu0 0
        %823 = vmatpush2.bf16.msra.mxu0 0
        %824 = vmatprep.mubr.bf16.mxu0 0
        %825 = vmatmul.mubr.bf16.gmra.mxu0 %v561
        %v826 = vpop.f32.mrf.mxu0
        %v827 = vadd.f32 %v778, %v826
        %v828 = vpop.f32.mrf.mxu0
        %v829 = vpop.f32.mrf.mxu0
        %v830 = vadd.f32 %v778, %v829
        %v831 = vpop.f32.mrf.mxu0
        %832 = vmatprep.mubr.bf16.mxu0 0
        %833 = vmatmul.mubr.bf16.gmra.mxu0 %v564
        %v834 = vpop.f32.mrf.mxu0
        %v835 = vadd.f32 %v778, %v834
        %v836 = vpop.f32.mrf.mxu0
        %v837 = vpop.f32.mrf.mxu0
        %v838 = vadd.f32 %v778, %v837
        %v839 = vpop.f32.mrf.mxu0
        %840 = vmatprep.mubr.bf16.mxu0 0
        %841 = vmatmul.mubr.bf16.gmra.mxu0 %v567
        %v842 = vpop.f32.mrf.mxu0
        %v843 = vadd.f32 %v778, %v842
        %v844 = vpop.f32.mrf.mxu0
        %v845 = vpop.f32.mrf.mxu0
        %v846 = vadd.f32 %v778, %v845
        %v847 = vpop.f32.mrf.mxu0
        %848 = vmatprep.mubr.bf16.mxu0 0
        %849 = vmatmul.mubr.bf16.gmra.mxu0 %v570
        %v850 = vpop.f32.mrf.mxu0
        %v851 = vadd.f32 %v778, %v850
        %v852 = vpop.f32.mrf.mxu0
        %v853 = vpop.f32.mrf.mxu0
        %v854 = vadd.f32 %v778, %v853
        %v855 = vpop.f32.mrf.mxu0
        %856 = vmatprep.mubr.bf16.mxu0 0
        %857 = vmatmul.mubr.bf16.gmra.mxu0 %v573
        %v858 = vpop.f32.mrf.mxu0
        %v859 = vadd.f32 %v778, %v858
        %v860 = vpop.f32.mrf.mxu0
        %v861 = vpop.f32.mrf.mxu0
        %v862 = vadd.f32 %v778, %v861
        %v863 = vpop.f32.mrf.mxu0
        %864 = vmatprep.mubr.bf16.mxu0 0
        %865 = vmatmul.mubr.bf16.gmra.mxu0 %v576
        %v866 = vpop.f32.mrf.mxu0
        %v867 = vadd.f32 %v778, %v866
        %v868 = vpop.f32.mrf.mxu0
        %v869 = vpop.f32.mrf.mxu0
        %v870 = vadd.f32 %v778, %v869
        %v871 = vpop.f32.mrf.mxu0
        %872 = vmatprep.mubr.bf16.mxu0 0
        %873 = vmatmul.mubr.bf16.gmra.mxu0 %v579
        %v874 = vpop.f32.mrf.mxu0
        %v875 = vadd.f32 %v778, %v874
        %v876 = vpop.f32.mrf.mxu0
        %v877 = vpop.f32.mrf.mxu0
        %v878 = vadd.f32 %v778, %v877
        %v879 = vpop.f32.mrf.mxu0
        %880 = vmatprep.mubr.bf16.mxu0 0
        %881 = vmatmul.mubr.bf16.gmra.mxu0 %v582
        %v882 = vpop.f32.mrf.mxu0
        %v883 = vadd.f32 %v778, %v882
        %v884 = vpop.f32.mrf.mxu0
        %v885 = vpop.f32.mrf.mxu0
        %v886 = vadd.f32 %v778, %v885
        %v887 = vpop.f32.mrf.mxu0
        %888 = vmatprep.mubr.bf16.mxu0 0
        %889 = vmatmul.mubr.bf16.gmra.mxu0 %v585
        %v890 = vpop.f32.mrf.mxu0
        %v891 = vadd.f32 %v778, %v890
        %v892 = vpop.f32.mrf.mxu0
        %v893 = vpop.f32.mrf.mxu0
        %v894 = vadd.f32 %v778, %v893
        %v895 = vpop.f32.mrf.mxu0
        %896 = vmatprep.mubr.bf16.mxu0 0
        %897 = vmatmul.mubr.bf16.gmra.mxu0 %v588
        %v898 = vpop.f32.mrf.mxu0
        %v899 = vadd.f32 %v778, %v898
        %v900 = vpop.f32.mrf.mxu0
        %v901 = vpop.f32.mrf.mxu0
        %v902 = vadd.f32 %v778, %v901
        %v903 = vpop.f32.mrf.mxu0
        %904 = vmatprep.mubr.bf16.mxu0 0
        %905 = vmatmul.mubr.bf16.gmra.mxu0 %v591
        %v906 = vpop.f32.mrf.mxu0
        %v907 = vadd.f32 %v778, %v906
        %v908 = vpop.f32.mrf.mxu0
        %v909 = vpop.f32.mrf.mxu0
        %v910 = vadd.f32 %v778, %v909
        %v911 = vpop.f32.mrf.mxu0
        %912 = vmatprep.mubr.bf16.mxu0 0
        %913 = vmatmul.mubr.bf16.gmra.mxu0 %v594
        %v914 = vpop.f32.mrf.mxu0
        %v915 = vadd.f32 %v778, %v914
        %v916 = vpop.f32.mrf.mxu0
        %v917 = vpop.f32.mrf.mxu0
        %v918 = vadd.f32 %v778, %v917
        %v919 = vpop.f32.mrf.mxu0
        %920 = vmatprep.mubr.bf16.mxu0 0
        %921 = vmatmul.mubr.bf16.gmra.mxu0 %v597
        %v922 = vpop.f32.mrf.mxu0
        %v923 = vadd.f32 %v778, %v922
        %v924 = vpop.f32.mrf.mxu0
        %v925 = vpop.f32.mrf.mxu0
        %v926 = vadd.f32 %v778, %v925
        %v927 = vpop.f32.mrf.mxu0
        %928 = vmatprep.mubr.bf16.mxu0 0
        %929 = vmatmul.mubr.bf16.gmra.mxu0 %v600
        %v930 = vpop.f32.mrf.mxu0
        %v931 = vadd.f32 %v778, %v930
        %v932 = vpop.f32.mrf.mxu0
        %v933 = vpop.f32.mrf.mxu0
        %v934 = vadd.f32 %v778, %v933
        %v935 = vpop.f32.mrf.mxu0
        %936 = vmatprep.mubr.bf16.mxu0 0
        %937 = vmatmul.mubr.bf16.gmra.mxu0 %v603
        %v938 = vpop.f32.mrf.mxu0
        %v939 = vadd.f32 %v778, %v938
        %v940 = vpop.f32.mrf.mxu0
        %v941 = vpop.f32.mrf.mxu0
        %v942 = vadd.f32 %v778, %v941
        %v943 = vpop.f32.mrf.mxu0
        %944 = vmatprep.mubr.bf16.mxu0 0
        %945 = vmatmul.mubr.bf16.gmra.mxu0 %v606
        %v946 = vpop.f32.mrf.mxu0
        %v947 = vadd.f32 %v778, %v946
        %v948 = vpop.f32.mrf.mxu0
        %v949 = vpop.f32.mrf.mxu0
        %v950 = vadd.f32 %v778, %v949
        %v951 = vpop.f32.mrf.mxu0
        %952 = vdwg.mxu0
        %v953 = vmax.f32 %v827, 0.0
        %v954 = vmax.f32 %v830, 0.0
        %v955 = vmax.f32 %v835, 0.0
        %v956 = vmax.f32 %v838, 0.0
        %v957 = vmax.f32 %v843, 0.0
        %v958 = vmax.f32 %v846, 0.0
        %v959 = vmax.f32 %v851, 0.0
        %v960 = vmax.f32 %v854, 0.0
        %v961 = vmax.f32 %v859, 0.0
        %v962 = vmax.f32 %v862, 0.0
        %v963 = vmax.f32 %v867, 0.0
        %v964 = vmax.f32 %v870, 0.0
        %v965 = vmax.f32 %v875, 0.0
        %v966 = vmax.f32 %v878, 0.0
        %v967 = vmax.f32 %v883, 0.0
        %v968 = vmax.f32 %v886, 0.0
        %v969 = vmax.f32 %v891, 0.0
        %v970 = vmax.f32 %v894, 0.0
        %v971 = vmax.f32 %v899, 0.0
        %v972 = vmax.f32 %v902, 0.0
        %v973 = vmax.f32 %v907, 0.0
        %v974 = vmax.f32 %v910, 0.0
        %v975 = vmax.f32 %v915, 0.0
        %v976 = vmax.f32 %v918, 0.0
        %v977 = vmax.f32 %v923, 0.0
        %v978 = vmax.f32 %v926, 0.0
        %v979 = vmax.f32 %v931, 0.0
        %v980 = vmax.f32 %v934, 0.0
        %v981 = vmax.f32 %v939, 0.0
        %v982 = vmax.f32 %v942, 0.0
        %v983 = vmax.f32 %v947, 0.0
        %v984 = vmax.f32 %v950, 0.0
        %v985 = vpack.c.bf16 %v954, %v953
        %v986 = vpack.c.bf16 %v956, %v955
        %v987 = vpack.c.bf16 %v958, %v957
        %v988 = vpack.c.bf16 %v960, %v959
        %v989 = vpack.c.bf16 %v962, %v961
        %v990 = vpack.c.bf16 %v964, %v963
        %v991 = vpack.c.bf16 %v966, %v965
        %v992 = vpack.c.bf16 %v968, %v967
        %v993 = vpack.c.bf16 %v970, %v969
        %v994 = vpack.c.bf16 %v972, %v971
        %v995 = vpack.c.bf16 %v974, %v973
        %v996 = vpack.c.bf16 %v976, %v975
        %v997 = vpack.c.bf16 %v978, %v977
        %v998 = vpack.c.bf16 %v980, %v979
        %v999 = vpack.c.bf16 %v982, %v981
        %v1000 = vpack.c.bf16 %v984, %v983
        %v1001 = vld [vmem:[%s6] sm:$0xf]
        %v1002 = vld [vmem:[%s7] sm:$0x1]
        %v1004 = vlaneseq
        %v1005 = vshrl.u32 %v1004, 7
        %v1006 = vsub.s32 0, %v1005
        %v1007 = vrot.slane %v1002, %v1006
        %vm1009 = vcmask 64512
        %v1011 = vsel %vm1009, %v985, 0
        %v1014 = vsel %vm1009, %v986, 0
        %v1017 = vsel %vm1009, %v987, 0
        %v1020 = vsel %vm1009, %v988, 0
        %v1023 = vsel %vm1009, %v989, 0
        %v1026 = vsel %vm1009, %v990, 0
        %v1029 = vsel %vm1009, %v991, 0
        %v1032 = vsel %vm1009, %v992, 0
        %v1035 = vsel %vm1009, %v993, 0
        %v1038 = vsel %vm1009, %v994, 0
        %v1041 = vsel %vm1009, %v995, 0
        %v1044 = vsel %vm1009, %v996, 0
        %v1047 = vsel %vm1009, %v997, 0
        %v1050 = vsel %vm1009, %v998, 0
        %v1053 = vsel %vm1009, %v999, 0
        %v1056 = vsel %vm1009, %v1000, 0
        %vm1058 = vcmask 1043456
        %v1060 = vsel %vm1058, %v1001, 0
        %1062 = vmatprep.subr.bf16.mxu0 0
        %1063 = vmatpush1.bf16.msra.mxu0 0
        %1064 = vmatprep.subr.bf16.mxu0 0
        %1065 = vmatpush1.bf16.msra.mxu0 0
        %1066 = vmatprep.subr.bf16.mxu0 0
        %1067 = vmatpush1.bf16.msra.mxu0 0
        %1068 = vmatprep.subr.bf16.mxu0 0
        %1069 = vmatpush1.bf16.msra.mxu0 0
        %1070 = vmatprep.subr.bf16.mxu0 0
        %1071 = vmatpush1.bf16.msra.mxu0 0
        %1072 = vmatprep.subr.bf16.mxu0 0
        %1073 = vmatpush1.bf16.msra.mxu0 0
        %1074 = vmatprep.subr.bf16.mxu0 0
        %1075 = vmatpush1.bf16.msra.mxu0 0
        %1076 = vmatprep.subr.bf16.mxu0 0
        %1077 = vmatpush1.bf16.msra.mxu0 %v1060
        %1078 = vmatprep.subr.bf16.mxu0 0
        %1079 = vmatpush2.bf16.msra.mxu0 0
        %1080 = vmatprep.subr.bf16.mxu0 0
        %1081 = vmatpush2.bf16.msra.mxu0 0
        %1082 = vmatprep.subr.bf16.mxu0 0
        %1083 = vmatpush2.bf16.msra.mxu0 0
        %1084 = vmatprep.subr.bf16.mxu0 0
        %1085 = vmatpush2.bf16.msra.mxu0 0
        %1086 = vmatprep.subr.bf16.mxu0 0
        %1087 = vmatpush2.bf16.msra.mxu0 0
        %1088 = vmatprep.subr.bf16.mxu0 0
        %1089 = vmatpush2.bf16.msra.mxu0 0
        %1090 = vmatprep.subr.bf16.mxu0 0
        %1091 = vmatpush2.bf16.msra.mxu0 0
        %1092 = vmatprep.subr.bf16.mxu0 0
        %1093 = vmatpush2.bf16.msra.mxu0 0
        %1094 = vmatprep.mubr.bf16.mxu0 0
        %1095 = vmatmul.mubr.bf16.gmra.mxu0 %v1011
        %v1096 = vpop.f32.mrf.mxu0
        %v1097 = vadd.f32 %v1007, %v1096
        %v1098 = vpop.f32.mrf.mxu0
        %v1099 = vpop.f32.mrf.mxu0
        %v1100 = vadd.f32 %v1007, %v1099
        %v1101 = vpop.f32.mrf.mxu0
        %1102 = vmatprep.mubr.bf16.mxu0 0
        %1103 = vmatmul.mubr.bf16.gmra.mxu0 %v1014
        %v1104 = vpop.f32.mrf.mxu0
        %v1105 = vadd.f32 %v1007, %v1104
        %v1106 = vpop.f32.mrf.mxu0
        %v1107 = vpop.f32.mrf.mxu0
        %v1108 = vadd.f32 %v1007, %v1107
        %v1109 = vpop.f32.mrf.mxu0
        %1110 = vmatprep.mubr.bf16.mxu0 0
        %1111 = vmatmul.mubr.bf16.gmra.mxu0 %v1017
        %v1112 = vpop.f32.mrf.mxu0
        %v1113 = vadd.f32 %v1007, %v1112
        %v1114 = vpop.f32.mrf.mxu0
        %v1115 = vpop.f32.mrf.mxu0
        %v1116 = vadd.f32 %v1007, %v1115
        %v1117 = vpop.f32.mrf.mxu0
        %1118 = vmatprep.mubr.bf16.mxu0 0
        %1119 = vmatmul.mubr.bf16.gmra.mxu0 %v1020
        %v1120 = vpop.f32.mrf.mxu0
        %v1121 = vadd.f32 %v1007, %v1120
        %v1122 = vpop.f32.mrf.mxu0
        %v1123 = vpop.f32.mrf.mxu0
        %v1124 = vadd.f32 %v1007, %v1123
        %v1125 = vpop.f32.mrf.mxu0
        %1126 = vmatprep.mubr.bf16.mxu0 0
        %1127 = vmatmul.mubr.bf16.gmra.mxu0 %v1023
        %v1128 = vpop.f32.mrf.mxu0
        %v1129 = vadd.f32 %v1007, %v1128
        %v1130 = vpop.f32.mrf.mxu0
        %v1131 = vpop.f32.mrf.mxu0
        %v1132 = vadd.f32 %v1007, %v1131
        %v1133 = vpop.f32.mrf.mxu0
        %1134 = vmatprep.mubr.bf16.mxu0 0
        %1135 = vmatmul.mubr.bf16.gmra.mxu0 %v1026
        %v1136 = vpop.f32.mrf.mxu0
        %v1137 = vadd.f32 %v1007, %v1136
        %v1138 = vpop.f32.mrf.mxu0
        %v1139 = vpop.f32.mrf.mxu0
        %v1140 = vadd.f32 %v1007, %v1139
        %v1141 = vpop.f32.mrf.mxu0
        %1142 = vmatprep.mubr.bf16.mxu0 0
        %1143 = vmatmul.mubr.bf16.gmra.mxu0 %v1029
        %v1144 = vpop.f32.mrf.mxu0
        %v1145 = vadd.f32 %v1007, %v1144
        %v1146 = vpop.f32.mrf.mxu0
        %v1147 = vpop.f32.mrf.mxu0
        %v1148 = vadd.f32 %v1007, %v1147
        %v1149 = vpop.f32.mrf.mxu0
        %1150 = vmatprep.mubr.bf16.mxu0 0
        %1151 = vmatmul.mubr.bf16.gmra.mxu0 %v1032
        %v1152 = vpop.f32.mrf.mxu0
        %v1153 = vadd.f32 %v1007, %v1152
        %v1154 = vpop.f32.mrf.mxu0
        %v1155 = vpop.f32.mrf.mxu0
        %v1156 = vadd.f32 %v1007, %v1155
        %v1157 = vpop.f32.mrf.mxu0
        %1158 = vmatprep.mubr.bf16.mxu0 0
        %1159 = vmatmul.mubr.bf16.gmra.mxu0 %v1035
        %v1160 = vpop.f32.mrf.mxu0
        %v1161 = vadd.f32 %v1007, %v1160
        %v1162 = vpop.f32.mrf.mxu0
        %v1163 = vpop.f32.mrf.mxu0
        %v1164 = vadd.f32 %v1007, %v1163
        %v1165 = vpop.f32.mrf.mxu0
        %1166 = vmatprep.mubr.bf16.mxu0 0
        %1167 = vmatmul.mubr.bf16.gmra.mxu0 %v1038
        %v1168 = vpop.f32.mrf.mxu0
        %v1169 = vadd.f32 %v1007, %v1168
        %v1170 = vpop.f32.mrf.mxu0
        %v1171 = vpop.f32.mrf.mxu0
        %v1172 = vadd.f32 %v1007, %v1171
        %v1173 = vpop.f32.mrf.mxu0
        %1174 = vmatprep.mubr.bf16.mxu0 0
        %1175 = vmatmul.mubr.bf16.gmra.mxu0 %v1041
        %v1176 = vpop.f32.mrf.mxu0
        %v1177 = vadd.f32 %v1007, %v1176
        %v1178 = vpop.f32.mrf.mxu0
        %v1179 = vpop.f32.mrf.mxu0
        %v1180 = vadd.f32 %v1007, %v1179
        %v1181 = vpop.f32.mrf.mxu0
        %1182 = vmatprep.mubr.bf16.mxu0 0
        %1183 = vmatmul.mubr.bf16.gmra.mxu0 %v1044
        %v1184 = vpop.f32.mrf.mxu0
        %v1185 = vadd.f32 %v1007, %v1184
        %v1186 = vpop.f32.mrf.mxu0
        %v1187 = vpop.f32.mrf.mxu0
        %v1188 = vadd.f32 %v1007, %v1187
        %v1189 = vpop.f32.mrf.mxu0
        %1190 = vmatprep.mubr.bf16.mxu0 0
        %1191 = vmatmul.mubr.bf16.gmra.mxu0 %v1047
        %v1192 = vpop.f32.mrf.mxu0
        %v1193 = vadd.f32 %v1007, %v1192
        %v1194 = vpop.f32.mrf.mxu0
        %v1195 = vpop.f32.mrf.mxu0
        %v1196 = vadd.f32 %v1007, %v1195
        %v1197 = vpop.f32.mrf.mxu0
        %1198 = vmatprep.mubr.bf16.mxu0 0
        %1199 = vmatmul.mubr.bf16.gmra.mxu0 %v1050
        %v1200 = vpop.f32.mrf.mxu0
        %v1201 = vadd.f32 %v1007, %v1200
        %v1202 = vpop.f32.mrf.mxu0
        %v1203 = vpop.f32.mrf.mxu0
        %v1204 = vadd.f32 %v1007, %v1203
        %v1205 = vpop.f32.mrf.mxu0
        %1206 = vmatprep.mubr.bf16.mxu0 0
        %1207 = vmatmul.mubr.bf16.gmra.mxu0 %v1053
        %v1208 = vpop.f32.mrf.mxu0
        %v1209 = vadd.f32 %v1007, %v1208
        %v1210 = vpop.f32.mrf.mxu0
        %v1211 = vpop.f32.mrf.mxu0
        %v1212 = vadd.f32 %v1007, %v1211
        %v1213 = vpop.f32.mrf.mxu0
        %1214 = vmatprep.mubr.bf16.mxu0 0
        %1215 = vmatmul.mubr.bf16.gmra.mxu0 %v1056
        %v1216 = vpop.f32.mrf.mxu0
        %v1217 = vadd.f32 %v1007, %v1216
        %v1218 = vpop.f32.mrf.mxu0
        %v1219 = vpop.f32.mrf.mxu0
        %v1220 = vadd.f32 %v1007, %v1219
        %v1221 = vpop.f32.mrf.mxu0
        %1222 = vdwg.mxu0
        %v1223 = vmax.f32 %v1097, 0.0
        %v1224 = vmax.f32 %v1100, 0.0
        %v1225 = vmax.f32 %v1105, 0.0
        %v1226 = vmax.f32 %v1108, 0.0
        %v1227 = vmax.f32 %v1113, 0.0
        %v1228 = vmax.f32 %v1116, 0.0
        %v1229 = vmax.f32 %v1121, 0.0
        %v1230 = vmax.f32 %v1124, 0.0
        %v1231 = vmax.f32 %v1129, 0.0
        %v1232 = vmax.f32 %v1132, 0.0
        %v1233 = vmax.f32 %v1137, 0.0
        %v1234 = vmax.f32 %v1140, 0.0
        %v1235 = vmax.f32 %v1145, 0.0
        %v1236 = vmax.f32 %v1148, 0.0
        %v1237 = vmax.f32 %v1153, 0.0
        %v1238 = vmax.f32 %v1156, 0.0
        %v1239 = vmax.f32 %v1161, 0.0
        %v1240 = vmax.f32 %v1164, 0.0
        %v1241 = vmax.f32 %v1169, 0.0
        %v1242 = vmax.f32 %v1172, 0.0
        %v1243 = vmax.f32 %v1177, 0.0
        %v1244 = vmax.f32 %v1180, 0.0
        %v1245 = vmax.f32 %v1185, 0.0
        %v1246 = vmax.f32 %v1188, 0.0
        %v1247 = vmax.f32 %v1193, 0.0
        %v1248 = vmax.f32 %v1196, 0.0
        %v1249 = vmax.f32 %v1201, 0.0
        %v1250 = vmax.f32 %v1204, 0.0
        %v1251 = vmax.f32 %v1209, 0.0
        %v1252 = vmax.f32 %v1212, 0.0
        %v1253 = vmax.f32 %v1217, 0.0
        %v1254 = vmax.f32 %v1220, 0.0
        %v1255 = vpack.c.bf16 %v1224, %v1223
        %v1256 = vpack.c.bf16 %v1226, %v1225
        %v1257 = vpack.c.bf16 %v1228, %v1227
        %v1258 = vpack.c.bf16 %v1230, %v1229
        %v1259 = vpack.c.bf16 %v1232, %v1231
        %v1260 = vpack.c.bf16 %v1234, %v1233
        %v1261 = vpack.c.bf16 %v1236, %v1235
        %v1262 = vpack.c.bf16 %v1238, %v1237
        %v1263 = vpack.c.bf16 %v1240, %v1239
        %v1264 = vpack.c.bf16 %v1242, %v1241
        %v1265 = vpack.c.bf16 %v1244, %v1243
        %v1266 = vpack.c.bf16 %v1246, %v1245
        %v1267 = vpack.c.bf16 %v1248, %v1247
        %v1268 = vpack.c.bf16 %v1250, %v1249
        %v1269 = vpack.c.bf16 %v1252, %v1251
        %v1270 = vpack.c.bf16 %v1254, %v1253
        %v1271 = vld [vmem:[%s8] sm:$0xf]
        %v1272 = vld [vmem:[%s8 + $0x4] sm:$0xf]
        %v1273 = vld [vmem:[%s8 + $0x8] sm:$0xf]
        %v1274 = vld [vmem:[%s8 + $0xc] sm:$0xf]
        %v1275 = vld [vmem:[%s9] sm:$0x1]
        %v1277 = vlaneseq
        %v1278 = vshrl.u32 %v1277, 7
        %v1279 = vsub.s32 0, %v1278
        %v1280 = vrot.slane %v1275, %v1279
        %v1286 = vunpack.c.l.b16 %v1271
        %v1287 = vunpack.c.l.b16 %v1272
        %v1288 = vunpack.c.l.b16 %v1273
        %v1289 = vunpack.c.l.b16 %v1274
        %v1290 = vpack.c.b16 %v1287, %v1286
        %v1291 = vpack.c.b16 %v1289, %v1288
        %v1295 = vsel %vm559, %v1255, 0
        %v1298 = vsel %vm559, %v1256, 0
        %v1301 = vsel %vm559, %v1257, 0
        %v1304 = vsel %vm559, %v1258, 0
        %v1307 = vsel %vm559, %v1259, 0
        %v1310 = vsel %vm559, %v1260, 0
        %v1313 = vsel %vm559, %v1261, 0
        %v1316 = vsel %vm559, %v1262, 0
        %v1319 = vsel %vm559, %v1263, 0
        %v1322 = vsel %vm559, %v1264, 0
        %v1325 = vsel %vm559, %v1265, 0
        %v1328 = vsel %vm559, %v1266, 0
        %v1331 = vsel %vm559, %v1267, 0
        %v1334 = vsel %vm559, %v1268, 0
        %v1337 = vsel %vm559, %v1269, 0
        %v1340 = vsel %vm559, %v1270, 0
        %1342 = vmatprep.subr.bf16.mxu0 0
        %1343 = vmatpush1.bf16.msra.mxu0 0
        %1344 = vmatprep.subr.bf16.mxu0 0
        %1345 = vmatpush1.bf16.msra.mxu0 0
        %1346 = vmatprep.subr.bf16.mxu0 0
        %1347 = vmatpush1.bf16.msra.mxu0 0
        %1348 = vmatprep.subr.bf16.mxu0 0
        %1349 = vmatpush1.bf16.msra.mxu0 0
        %1350 = vmatprep.subr.bf16.mxu0 0
        %1351 = vmatpush1.bf16.msra.mxu0 0
        %1352 = vmatprep.subr.bf16.mxu0 0
        %1353 = vmatpush1.bf16.msra.mxu0 0
        %1354 = vmatprep.subr.bf16.mxu0 0
        %1355 = vmatpush1.bf16.msra.mxu0 %v1291
        %1356 = vmatprep.subr.bf16.mxu0 0
        %1357 = vmatpush1.bf16.msra.mxu0 %v1290
        %1358 = vmatprep.subr.bf16.mxu0 0
        %1359 = vmatpush2.bf16.msra.mxu0 0
        %1360 = vmatprep.subr.bf16.mxu0 0
        %1361 = vmatpush2.bf16.msra.mxu0 0
        %1362 = vmatprep.subr.bf16.mxu0 0
        %1363 = vmatpush2.bf16.msra.mxu0 0
        %1364 = vmatprep.subr.bf16.mxu0 0
        %1365 = vmatpush2.bf16.msra.mxu0 0
        %1366 = vmatprep.subr.bf16.mxu0 0
        %1367 = vmatpush2.bf16.msra.mxu0 0
        %1368 = vmatprep.subr.bf16.mxu0 0
        %1369 = vmatpush2.bf16.msra.mxu0 0
        %1370 = vmatprep.subr.bf16.mxu0 0
        %1371 = vmatpush2.bf16.msra.mxu0 0
        %1372 = vmatprep.subr.bf16.mxu0 0
        %1373 = vmatpush2.bf16.msra.mxu0 0
        %1374 = vmatprep.mubr.bf16.mxu0 0
        %1375 = vmatmul.mubr.bf16.gmra.mxu0 %v1295
        %v1376 = vpop.f32.mrf.mxu0
        %v1377 = vadd.f32 %v1280, %v1376
        %v1378 = vpop.f32.mrf.mxu0
        %v1379 = vpop.f32.mrf.mxu0
        %v1380 = vadd.f32 %v1280, %v1379
        %v1381 = vpop.f32.mrf.mxu0
        %1382 = vmatprep.mubr.bf16.mxu0 0
        %1383 = vmatmul.mubr.bf16.gmra.mxu0 %v1298
        %v1384 = vpop.f32.mrf.mxu0
        %v1385 = vadd.f32 %v1280, %v1384
        %v1386 = vpop.f32.mrf.mxu0
        %v1387 = vpop.f32.mrf.mxu0
        %v1388 = vadd.f32 %v1280, %v1387
        %v1389 = vpop.f32.mrf.mxu0
        %1390 = vmatprep.mubr.bf16.mxu0 0
        %1391 = vmatmul.mubr.bf16.gmra.mxu0 %v1301
        %v1392 = vpop.f32.mrf.mxu0
        %v1393 = vadd.f32 %v1280, %v1392
        %v1394 = vpop.f32.mrf.mxu0
        %v1395 = vpop.f32.mrf.mxu0
        %v1396 = vadd.f32 %v1280, %v1395
        %v1397 = vpop.f32.mrf.mxu0
        %1398 = vmatprep.mubr.bf16.mxu0 0
        %1399 = vmatmul.mubr.bf16.gmra.mxu0 %v1304
        %v1400 = vpop.f32.mrf.mxu0
        %v1401 = vadd.f32 %v1280, %v1400
        %v1402 = vpop.f32.mrf.mxu0
        %v1403 = vpop.f32.mrf.mxu0
        %v1404 = vadd.f32 %v1280, %v1403
        %v1405 = vpop.f32.mrf.mxu0
        %1406 = vmatprep.mubr.bf16.mxu0 0
        %1407 = vmatmul.mubr.bf16.gmra.mxu0 %v1307
        %v1408 = vpop.f32.mrf.mxu0
        %v1409 = vadd.f32 %v1280, %v1408
        %v1410 = vpop.f32.mrf.mxu0
        %v1411 = vpop.f32.mrf.mxu0
        %v1412 = vadd.f32 %v1280, %v1411
        %v1413 = vpop.f32.mrf.mxu0
        %1414 = vmatprep.mubr.bf16.mxu0 0
        %1415 = vmatmul.mubr.bf16.gmra.mxu0 %v1310
        %v1416 = vpop.f32.mrf.mxu0
        %v1417 = vadd.f32 %v1280, %v1416
        %v1418 = vpop.f32.mrf.mxu0
        %v1419 = vpop.f32.mrf.mxu0
        %v1420 = vadd.f32 %v1280, %v1419
        %v1421 = vpop.f32.mrf.mxu0
        %1422 = vmatprep.mubr.bf16.mxu0 0
        %1423 = vmatmul.mubr.bf16.gmra.mxu0 %v1313
        %v1424 = vpop.f32.mrf.mxu0
        %v1425 = vadd.f32 %v1280, %v1424
        %v1426 = vpop.f32.mrf.mxu0
        %v1427 = vpop.f32.mrf.mxu0
        %v1428 = vadd.f32 %v1280, %v1427
        %v1429 = vpop.f32.mrf.mxu0
        %1430 = vmatprep.mubr.bf16.mxu0 0
        %1431 = vmatmul.mubr.bf16.gmra.mxu0 %v1316
        %v1432 = vpop.f32.mrf.mxu0
        %v1433 = vadd.f32 %v1280, %v1432
        %v1434 = vpop.f32.mrf.mxu0
        %v1435 = vpop.f32.mrf.mxu0
        %v1436 = vadd.f32 %v1280, %v1435
        %v1437 = vpop.f32.mrf.mxu0
        %1438 = vmatprep.mubr.bf16.mxu0 0
        %1439 = vmatmul.mubr.bf16.gmra.mxu0 %v1319
        %v1440 = vpop.f32.mrf.mxu0
        %v1441 = vadd.f32 %v1280, %v1440
        %v1442 = vpop.f32.mrf.mxu0
        %v1443 = vpop.f32.mrf.mxu0
        %v1444 = vadd.f32 %v1280, %v1443
        %v1445 = vpop.f32.mrf.mxu0
        %1446 = vmatprep.mubr.bf16.mxu0 0
        %1447 = vmatmul.mubr.bf16.gmra.mxu0 %v1322
        %v1448 = vpop.f32.mrf.mxu0
        %v1449 = vadd.f32 %v1280, %v1448
        %v1450 = vpop.f32.mrf.mxu0
        %v1451 = vpop.f32.mrf.mxu0
        %v1452 = vadd.f32 %v1280, %v1451
        %v1453 = vpop.f32.mrf.mxu0
        %1454 = vmatprep.mubr.bf16.mxu0 0
        %1455 = vmatmul.mubr.bf16.gmra.mxu0 %v1325
        %v1456 = vpop.f32.mrf.mxu0
        %v1457 = vadd.f32 %v1280, %v1456
        %v1458 = vpop.f32.mrf.mxu0
        %v1459 = vpop.f32.mrf.mxu0
        %v1460 = vadd.f32 %v1280, %v1459
        %v1461 = vpop.f32.mrf.mxu0
        %1462 = vmatprep.mubr.bf16.mxu0 0
        %1463 = vmatmul.mubr.bf16.gmra.mxu0 %v1328
        %v1464 = vpop.f32.mrf.mxu0
        %v1465 = vadd.f32 %v1280, %v1464
        %v1466 = vpop.f32.mrf.mxu0
        %v1467 = vpop.f32.mrf.mxu0
        %v1468 = vadd.f32 %v1280, %v1467
        %v1469 = vpop.f32.mrf.mxu0
        %1470 = vmatprep.mubr.bf16.mxu0 0
        %1471 = vmatmul.mubr.bf16.gmra.mxu0 %v1331
        %v1472 = vpop.f32.mrf.mxu0
        %v1473 = vadd.f32 %v1280, %v1472
        %v1474 = vpop.f32.mrf.mxu0
        %v1475 = vpop.f32.mrf.mxu0
        %v1476 = vadd.f32 %v1280, %v1475
        %v1477 = vpop.f32.mrf.mxu0
        %1478 = vmatprep.mubr.bf16.mxu0 0
        %1479 = vmatmul.mubr.bf16.gmra.mxu0 %v1334
        %v1480 = vpop.f32.mrf.mxu0
        %v1481 = vadd.f32 %v1280, %v1480
        %v1482 = vpop.f32.mrf.mxu0
        %v1483 = vpop.f32.mrf.mxu0
        %v1484 = vadd.f32 %v1280, %v1483
        %v1485 = vpop.f32.mrf.mxu0
        %1486 = vmatprep.mubr.bf16.mxu0 0
        %1487 = vmatmul.mubr.bf16.gmra.mxu0 %v1337
        %v1488 = vpop.f32.mrf.mxu0
        %v1489 = vadd.f32 %v1280, %v1488
        %v1490 = vpop.f32.mrf.mxu0
        %v1491 = vpop.f32.mrf.mxu0
        %v1492 = vadd.f32 %v1280, %v1491
        %v1493 = vpop.f32.mrf.mxu0
        %1494 = vmatprep.mubr.bf16.mxu0 0
        %1495 = vmatmul.mubr.bf16.gmra.mxu0 %v1340
        %v1496 = vpop.f32.mrf.mxu0
        %v1497 = vadd.f32 %v1280, %v1496
        %v1498 = vpop.f32.mrf.mxu0
        %v1499 = vpop.f32.mrf.mxu0
        %v1500 = vadd.f32 %v1280, %v1499
        %v1501 = vpop.f32.mrf.mxu0
        %1502 = vdwg.mxu0
        %v1503 = vmax.f32 %v1377, 0.0
        %v1504 = vmax.f32 %v1380, 0.0
        %v1505 = vmax.f32 %v1385, 0.0
        %v1506 = vmax.f32 %v1388, 0.0
        %v1507 = vmax.f32 %v1393, 0.0
        %v1508 = vmax.f32 %v1396, 0.0
        %v1509 = vmax.f32 %v1401, 0.0
        %v1510 = vmax.f32 %v1404, 0.0
        %v1511 = vmax.f32 %v1409, 0.0
        %v1512 = vmax.f32 %v1412, 0.0
        %v1513 = vmax.f32 %v1417, 0.0
        %v1514 = vmax.f32 %v1420, 0.0
        %v1515 = vmax.f32 %v1425, 0.0
        %v1516 = vmax.f32 %v1428, 0.0
        %v1517 = vmax.f32 %v1433, 0.0
        %v1518 = vmax.f32 %v1436, 0.0
        %v1519 = vmax.f32 %v1441, 0.0
        %v1520 = vmax.f32 %v1444, 0.0
        %v1521 = vmax.f32 %v1449, 0.0
        %v1522 = vmax.f32 %v1452, 0.0
        %v1523 = vmax.f32 %v1457, 0.0
        %v1524 = vmax.f32 %v1460, 0.0
        %v1525 = vmax.f32 %v1465, 0.0
        %v1526 = vmax.f32 %v1468, 0.0
        %v1527 = vmax.f32 %v1473, 0.0
        %v1528 = vmax.f32 %v1476, 0.0
        %v1529 = vmax.f32 %v1481, 0.0
        %v1530 = vmax.f32 %v1484, 0.0
        %v1531 = vmax.f32 %v1489, 0.0
        %v1532 = vmax.f32 %v1492, 0.0
        %v1533 = vmax.f32 %v1497, 0.0
        %v1534 = vmax.f32 %v1500, 0.0
        %vm1535 = vcmp.eq.s32.totalorder %v424, 0
        %vm1536 = vcmp.eq.s32.totalorder %v425, 0
        %vm1537 = vcmp.eq.s32.totalorder %v426, 0
        %vm1538 = vcmp.eq.s32.totalorder %v427, 0
        %vm1539 = vcmp.eq.s32.totalorder %v428, 0
        %vm1540 = vcmp.eq.s32.totalorder %v429, 0
        %vm1541 = vcmp.eq.s32.totalorder %v430, 0
        %vm1542 = vcmp.eq.s32.totalorder %v431, 0
        %vm1543 = vcmp.eq.s32.totalorder %v432, 0
        %vm1544 = vcmp.eq.s32.totalorder %v433, 0
        %vm1545 = vcmp.eq.s32.totalorder %v434, 0
        %vm1546 = vcmp.eq.s32.totalorder %v435, 0
        %vm1547 = vcmp.eq.s32.totalorder %v436, 0
        %vm1548 = vcmp.eq.s32.totalorder %v437, 0
        %vm1549 = vcmp.eq.s32.totalorder %v438, 0
        %vm1550 = vcmp.eq.s32.totalorder %v439, 0
        %vm1551 = vcmp.eq.s32.totalorder %v440, 0
        %vm1552 = vcmp.eq.s32.totalorder %v441, 0
        %vm1553 = vcmp.eq.s32.totalorder %v442, 0
        %vm1554 = vcmp.eq.s32.totalorder %v443, 0
        %vm1555 = vcmp.eq.s32.totalorder %v444, 0
        %vm1556 = vcmp.eq.s32.totalorder %v445, 0
        %vm1557 = vcmp.eq.s32.totalorder %v446, 0
        %vm1558 = vcmp.eq.s32.totalorder %v447, 0
        %vm1559 = vcmp.eq.s32.totalorder %v448, 0
        %vm1560 = vcmp.eq.s32.totalorder %v449, 0
        %vm1561 = vcmp.eq.s32.totalorder %v450, 0
        %vm1562 = vcmp.eq.s32.totalorder %v451, 0
        %vm1563 = vcmp.eq.s32.totalorder %v452, 0
        %vm1564 = vcmp.eq.s32.totalorder %v453, 0
        %vm1565 = vcmp.eq.s32.totalorder %v454, 0
        %vm1566 = vcmp.eq.s32.totalorder %v455, 0
        %v1567 = vsel %vm1535, %v643, 0.0
        %v1568 = vsel %vm1536, %v646, 0.0
        %v1569 = vsel %vm1537, %v651, 0.0
        %v1570 = vsel %vm1538, %v654, 0.0
        %v1571 = vsel %vm1539, %v659, 0.0
        %v1572 = vsel %vm1540, %v662, 0.0
        %v1573 = vsel %vm1541, %v667, 0.0
        %v1574 = vsel %vm1542, %v670, 0.0
        %v1575 = vsel %vm1543, %v675, 0.0
        %v1576 = vsel %vm1544, %v678, 0.0
        %v1577 = vsel %vm1545, %v683, 0.0
        %v1578 = vsel %vm1546, %v686, 0.0
        %v1579 = vsel %vm1547, %v691, 0.0
        %v1580 = vsel %vm1548, %v694, 0.0
        %v1581 = vsel %vm1549, %v699, 0.0
        %v1582 = vsel %vm1550, %v702, 0.0
        %v1583 = vsel %vm1551, %v707, 0.0
        %v1584 = vsel %vm1552, %v710, 0.0
        %v1585 = vsel %vm1553, %v715, 0.0
        %v1586 = vsel %vm1554, %v718, 0.0
        %v1587 = vsel %vm1555, %v723, 0.0
        %v1588 = vsel %vm1556, %v726, 0.0
        %v1589 = vsel %vm1557, %v731, 0.0
        %v1590 = vsel %vm1558, %v734, 0.0
        %v1591 = vsel %vm1559, %v739, 0.0
        %v1592 = vsel %vm1560, %v742, 0.0
        %v1593 = vsel %vm1561, %v747, 0.0
        %v1594 = vsel %vm1562, %v750, 0.0
        %v1595 = vsel %vm1563, %v755, 0.0
        %v1596 = vsel %vm1564, %v758, 0.0
        %v1597 = vsel %vm1565, %v763, 0.0
        %v1598 = vsel %vm1566, %v766, 0.0
        %vm1599 = vcmp.eq.s32.totalorder %v424, 1
        %vm1600 = vcmp.eq.s32.totalorder %v425, 1
        %vm1601 = vcmp.eq.s32.totalorder %v426, 1
        %vm1602 = vcmp.eq.s32.totalorder %v427, 1
        %vm1603 = vcmp.eq.s32.totalorder %v428, 1
        %vm1604 = vcmp.eq.s32.totalorder %v429, 1
        %vm1605 = vcmp.eq.s32.totalorder %v430, 1
        %vm1606 = vcmp.eq.s32.totalorder %v431, 1
        %vm1607 = vcmp.eq.s32.totalorder %v432, 1
        %vm1608 = vcmp.eq.s32.totalorder %v433, 1
        %vm1609 = vcmp.eq.s32.totalorder %v434, 1
        %vm1610 = vcmp.eq.s32.totalorder %v435, 1
        %vm1611 = vcmp.eq.s32.totalorder %v436, 1
        %vm1612 = vcmp.eq.s32.totalorder %v437, 1
        %vm1613 = vcmp.eq.s32.totalorder %v438, 1
        %vm1614 = vcmp.eq.s32.totalorder %v439, 1
        %vm1615 = vcmp.eq.s32.totalorder %v440, 1
        %vm1616 = vcmp.eq.s32.totalorder %v441, 1
        %vm1617 = vcmp.eq.s32.totalorder %v442, 1
        %vm1618 = vcmp.eq.s32.totalorder %v443, 1
        %vm1619 = vcmp.eq.s32.totalorder %v444, 1
        %vm1620 = vcmp.eq.s32.totalorder %v445, 1
        %vm1621 = vcmp.eq.s32.totalorder %v446, 1
        %vm1622 = vcmp.eq.s32.totalorder %v447, 1
        %vm1623 = vcmp.eq.s32.totalorder %v448, 1
        %vm1624 = vcmp.eq.s32.totalorder %v449, 1
        %vm1625 = vcmp.eq.s32.totalorder %v450, 1
        %vm1626 = vcmp.eq.s32.totalorder %v451, 1
        %vm1627 = vcmp.eq.s32.totalorder %v452, 1
        %vm1628 = vcmp.eq.s32.totalorder %v453, 1
        %vm1629 = vcmp.eq.s32.totalorder %v454, 1
        %vm1630 = vcmp.eq.s32.totalorder %v455, 1
        %v1631 = vsel %vm1599, %v643, 0.0
        %v1632 = vsel %vm1600, %v646, 0.0
        %v1633 = vsel %vm1601, %v651, 0.0
        %v1634 = vsel %vm1602, %v654, 0.0
        %v1635 = vsel %vm1603, %v659, 0.0
        %v1636 = vsel %vm1604, %v662, 0.0
        %v1637 = vsel %vm1605, %v667, 0.0
        %v1638 = vsel %vm1606, %v670, 0.0
        %v1639 = vsel %vm1607, %v675, 0.0
        %v1640 = vsel %vm1608, %v678, 0.0
        %v1641 = vsel %vm1609, %v683, 0.0
        %v1642 = vsel %vm1610, %v686, 0.0
        %v1643 = vsel %vm1611, %v691, 0.0
        %v1644 = vsel %vm1612, %v694, 0.0
        %v1645 = vsel %vm1613, %v699, 0.0
        %v1646 = vsel %vm1614, %v702, 0.0
        %v1647 = vsel %vm1615, %v707, 0.0
        %v1648 = vsel %vm1616, %v710, 0.0
        %v1649 = vsel %vm1617, %v715, 0.0
        %v1650 = vsel %vm1618, %v718, 0.0
        %v1651 = vsel %vm1619, %v723, 0.0
        %v1652 = vsel %vm1620, %v726, 0.0
        %v1653 = vsel %vm1621, %v731, 0.0
        %v1654 = vsel %vm1622, %v734, 0.0
        %v1655 = vsel %vm1623, %v739, 0.0
        %v1656 = vsel %vm1624, %v742, 0.0
        %v1657 = vsel %vm1625, %v747, 0.0
        %v1658 = vsel %vm1626, %v750, 0.0
        %v1659 = vsel %vm1627, %v755, 0.0
        %v1660 = vsel %vm1628, %v758, 0.0
        %v1661 = vsel %vm1629, %v763, 0.0
        %v1662 = vsel %vm1630, %v766, 0.0
        %vm1663 = vcmp.eq.s32.totalorder %v424, 2
        %vm1664 = vcmp.eq.s32.totalorder %v425, 2
        %vm1665 = vcmp.eq.s32.totalorder %v426, 2
        %vm1666 = vcmp.eq.s32.totalorder %v427, 2
        %vm1667 = vcmp.eq.s32.totalorder %v428, 2
        %vm1668 = vcmp.eq.s32.totalorder %v429, 2
        %vm1669 = vcmp.eq.s32.totalorder %v430, 2
        %vm1670 = vcmp.eq.s32.totalorder %v431, 2
        %vm1671 = vcmp.eq.s32.totalorder %v432, 2
        %vm1672 = vcmp.eq.s32.totalorder %v433, 2
        %vm1673 = vcmp.eq.s32.totalorder %v434, 2
        %vm1674 = vcmp.eq.s32.totalorder %v435, 2
        %vm1675 = vcmp.eq.s32.totalorder %v436, 2
        %vm1676 = vcmp.eq.s32.totalorder %v437, 2
        %vm1677 = vcmp.eq.s32.totalorder %v438, 2
        %vm1678 = vcmp.eq.s32.totalorder %v439, 2
        %vm1679 = vcmp.eq.s32.totalorder %v440, 2
        %vm1680 = vcmp.eq.s32.totalorder %v441, 2
        %vm1681 = vcmp.eq.s32.totalorder %v442, 2
        %vm1682 = vcmp.eq.s32.totalorder %v443, 2
        %vm1683 = vcmp.eq.s32.totalorder %v444, 2
        %vm1684 = vcmp.eq.s32.totalorder %v445, 2
        %vm1685 = vcmp.eq.s32.totalorder %v446, 2
        %vm1686 = vcmp.eq.s32.totalorder %v447, 2
        %vm1687 = vcmp.eq.s32.totalorder %v448, 2
        %vm1688 = vcmp.eq.s32.totalorder %v449, 2
        %vm1689 = vcmp.eq.s32.totalorder %v450, 2
        %vm1690 = vcmp.eq.s32.totalorder %v451, 2
        %vm1691 = vcmp.eq.s32.totalorder %v452, 2
        %vm1692 = vcmp.eq.s32.totalorder %v453, 2
        %vm1693 = vcmp.eq.s32.totalorder %v454, 2
        %vm1694 = vcmp.eq.s32.totalorder %v455, 2
        %v1695 = vsel %vm1663, %v643, 0.0
        %v1696 = vsel %vm1664, %v646, 0.0
        %v1697 = vsel %vm1665, %v651, 0.0
        %v1698 = vsel %vm1666, %v654, 0.0
        %v1699 = vsel %vm1667, %v659, 0.0
        %v1700 = vsel %vm1668, %v662, 0.0
        %v1701 = vsel %vm1669, %v667, 0.0
        %v1702 = vsel %vm1670, %v670, 0.0
        %v1703 = vsel %vm1671, %v675, 0.0
        %v1704 = vsel %vm1672, %v678, 0.0
        %v1705 = vsel %vm1673, %v683, 0.0
        %v1706 = vsel %vm1674, %v686, 0.0
        %v1707 = vsel %vm1675, %v691, 0.0
        %v1708 = vsel %vm1676, %v694, 0.0
        %v1709 = vsel %vm1677, %v699, 0.0
        %v1710 = vsel %vm1678, %v702, 0.0
        %v1711 = vsel %vm1679, %v707, 0.0
        %v1712 = vsel %vm1680, %v710, 0.0
        %v1713 = vsel %vm1681, %v715, 0.0
        %v1714 = vsel %vm1682, %v718, 0.0
        %v1715 = vsel %vm1683, %v723, 0.0
        %v1716 = vsel %vm1684, %v726, 0.0
        %v1717 = vsel %vm1685, %v731, 0.0
        %v1718 = vsel %vm1686, %v734, 0.0
        %v1719 = vsel %vm1687, %v739, 0.0
        %v1720 = vsel %vm1688, %v742, 0.0
        %v1721 = vsel %vm1689, %v747, 0.0
        %v1722 = vsel %vm1690, %v750, 0.0
        %v1723 = vsel %vm1691, %v755, 0.0
        %v1724 = vsel %vm1692, %v758, 0.0
        %v1725 = vsel %vm1693, %v763, 0.0
        %v1726 = vsel %vm1694, %v766, 0.0
        %vm1727 = vcmp.eq.s32.totalorder %v424, 3
        %vm1728 = vcmp.eq.s32.totalorder %v425, 3
        %vm1729 = vcmp.eq.s32.totalorder %v426, 3
        %vm1730 = vcmp.eq.s32.totalorder %v427, 3
        %vm1731 = vcmp.eq.s32.totalorder %v428, 3
        %vm1732 = vcmp.eq.s32.totalorder %v429, 3
        %vm1733 = vcmp.eq.s32.totalorder %v430, 3
        %vm1734 = vcmp.eq.s32.totalorder %v431, 3
        %vm1735 = vcmp.eq.s32.totalorder %v432, 3
        %vm1736 = vcmp.eq.s32.totalorder %v433, 3
        %vm1737 = vcmp.eq.s32.totalorder %v434, 3
        %vm1738 = vcmp.eq.s32.totalorder %v435, 3
        %vm1739 = vcmp.eq.s32.totalorder %v436, 3
        %vm1740 = vcmp.eq.s32.totalorder %v437, 3
        %vm1741 = vcmp.eq.s32.totalorder %v438, 3
        %vm1742 = vcmp.eq.s32.totalorder %v439, 3
        %vm1743 = vcmp.eq.s32.totalorder %v440, 3
        %vm1744 = vcmp.eq.s32.totalorder %v441, 3
        %vm1745 = vcmp.eq.s32.totalorder %v442, 3
        %vm1746 = vcmp.eq.s32.totalorder %v443, 3
        %vm1747 = vcmp.eq.s32.totalorder %v444, 3
        %vm1748 = vcmp.eq.s32.totalorder %v445, 3
        %vm1749 = vcmp.eq.s32.totalorder %v446, 3
        %vm1750 = vcmp.eq.s32.totalorder %v447, 3
        %vm1751 = vcmp.eq.s32.totalorder %v448, 3
        %vm1752 = vcmp.eq.s32.totalorder %v449, 3
        %vm1753 = vcmp.eq.s32.totalorder %v450, 3
        %vm1754 = vcmp.eq.s32.totalorder %v451, 3
        %vm1755 = vcmp.eq.s32.totalorder %v452, 3
        %vm1756 = vcmp.eq.s32.totalorder %v453, 3
        %vm1757 = vcmp.eq.s32.totalorder %v454, 3
        %vm1758 = vcmp.eq.s32.totalorder %v455, 3
        %v1759 = vsel %vm1727, %v643, 0.0
        %v1760 = vsel %vm1728, %v646, 0.0
        %v1761 = vsel %vm1729, %v651, 0.0
        %v1762 = vsel %vm1730, %v654, 0.0
        %v1763 = vsel %vm1731, %v659, 0.0
        %v1764 = vsel %vm1732, %v662, 0.0
        %v1765 = vsel %vm1733, %v667, 0.0
        %v1766 = vsel %vm1734, %v670, 0.0
        %v1767 = vsel %vm1735, %v675, 0.0
        %v1768 = vsel %vm1736, %v678, 0.0
        %v1769 = vsel %vm1737, %v683, 0.0
        %v1770 = vsel %vm1738, %v686, 0.0
        %v1771 = vsel %vm1739, %v691, 0.0
        %v1772 = vsel %vm1740, %v694, 0.0
        %v1773 = vsel %vm1741, %v699, 0.0
        %v1774 = vsel %vm1742, %v702, 0.0
        %v1775 = vsel %vm1743, %v707, 0.0
        %v1776 = vsel %vm1744, %v710, 0.0
        %v1777 = vsel %vm1745, %v715, 0.0
        %v1778 = vsel %vm1746, %v718, 0.0
        %v1779 = vsel %vm1747, %v723, 0.0
        %v1780 = vsel %vm1748, %v726, 0.0
        %v1781 = vsel %vm1749, %v731, 0.0
        %v1782 = vsel %vm1750, %v734, 0.0
        %v1783 = vsel %vm1751, %v739, 0.0
        %v1784 = vsel %vm1752, %v742, 0.0
        %v1785 = vsel %vm1753, %v747, 0.0
        %v1786 = vsel %vm1754, %v750, 0.0
        %v1787 = vsel %vm1755, %v755, 0.0
        %v1788 = vsel %vm1756, %v758, 0.0
        %v1789 = vsel %vm1757, %v763, 0.0
        %v1790 = vsel %vm1758, %v766, 0.0
        %1823 = vrot.lane.b32.xlu0 %v1631, 32
        %v1824 = vpop.permute.xlu0 %1823
        %1825 = vrot.lane.b32.xlu0 %v1632, 32
        %v1826 = vpop.permute.xlu0 %1825
        %1827 = vrot.lane.b32.xlu0 %v1633, 32
        %v1828 = vpop.permute.xlu0 %1827
        %1829 = vrot.lane.b32.xlu0 %v1634, 32
        %v1830 = vpop.permute.xlu0 %1829
        %1831 = vrot.lane.b32.xlu0 %v1635, 32
        %v1832 = vpop.permute.xlu0 %1831
        %1833 = vrot.lane.b32.xlu0 %v1636, 32
        %v1834 = vpop.permute.xlu0 %1833
        %1835 = vrot.lane.b32.xlu0 %v1637, 32
        %v1836 = vpop.permute.xlu0 %1835
        %1837 = vrot.lane.b32.xlu0 %v1638, 32
        %v1838 = vpop.permute.xlu0 %1837
        %1839 = vrot.lane.b32.xlu0 %v1639, 32
        %v1840 = vpop.permute.xlu0 %1839
        %1841 = vrot.lane.b32.xlu0 %v1640, 32
        %v1842 = vpop.permute.xlu0 %1841
        %1843 = vrot.lane.b32.xlu0 %v1641, 32
        %v1844 = vpop.permute.xlu0 %1843
        %1845 = vrot.lane.b32.xlu0 %v1642, 32
        %v1846 = vpop.permute.xlu0 %1845
        %1847 = vrot.lane.b32.xlu0 %v1643, 32
        %v1848 = vpop.permute.xlu0 %1847
        %1849 = vrot.lane.b32.xlu0 %v1644, 32
        %v1850 = vpop.permute.xlu0 %1849
        %1851 = vrot.lane.b32.xlu0 %v1645, 32
        %v1852 = vpop.permute.xlu0 %1851
        %1853 = vrot.lane.b32.xlu0 %v1646, 32
        %v1854 = vpop.permute.xlu0 %1853
        %1855 = vrot.lane.b32.xlu0 %v1647, 32
        %v1856 = vpop.permute.xlu0 %1855
        %1857 = vrot.lane.b32.xlu0 %v1648, 32
        %v1858 = vpop.permute.xlu0 %1857
        %1859 = vrot.lane.b32.xlu0 %v1649, 32
        %v1860 = vpop.permute.xlu0 %1859
        %1861 = vrot.lane.b32.xlu0 %v1650, 32
        %v1862 = vpop.permute.xlu0 %1861
        %1863 = vrot.lane.b32.xlu0 %v1651, 32
        %v1864 = vpop.permute.xlu0 %1863
        %1865 = vrot.lane.b32.xlu0 %v1652, 32
        %v1866 = vpop.permute.xlu0 %1865
        %1867 = vrot.lane.b32.xlu0 %v1653, 32
        %v1868 = vpop.permute.xlu0 %1867
        %1869 = vrot.lane.b32.xlu0 %v1654, 32
        %v1870 = vpop.permute.xlu0 %1869
        %1871 = vrot.lane.b32.xlu0 %v1655, 32
        %v1872 = vpop.permute.xlu0 %1871
        %1873 = vrot.lane.b32.xlu0 %v1656, 32
        %v1874 = vpop.permute.xlu0 %1873
        %1875 = vrot.lane.b32.xlu0 %v1657, 32
        %v1876 = vpop.permute.xlu0 %1875
        %1877 = vrot.lane.b32.xlu0 %v1658, 32
        %v1878 = vpop.permute.xlu0 %1877
        %1879 = vrot.lane.b32.xlu0 %v1659, 32
        %v1880 = vpop.permute.xlu0 %1879
        %1881 = vrot.lane.b32.xlu0 %v1660, 32
        %v1882 = vpop.permute.xlu0 %1881
        %1883 = vrot.lane.b32.xlu0 %v1661, 32
        %v1884 = vpop.permute.xlu0 %1883
        %1885 = vrot.lane.b32.xlu0 %v1662, 32
        %v1886 = vpop.permute.xlu0 %1885
        %1951 = vrot.lane.b32.xlu0 %v1695, 64
        %v1952 = vpop.permute.xlu0 %1951
        %1953 = vrot.lane.b32.xlu0 %v1696, 64
        %v1954 = vpop.permute.xlu0 %1953
        %1955 = vrot.lane.b32.xlu0 %v1697, 64
        %v1956 = vpop.permute.xlu0 %1955
        %1957 = vrot.lane.b32.xlu0 %v1698, 64
        %v1958 = vpop.permute.xlu0 %1957
        %1959 = vrot.lane.b32.xlu0 %v1699, 64
        %v1960 = vpop.permute.xlu0 %1959
        %1961 = vrot.lane.b32.xlu0 %v1700, 64
        %v1962 = vpop.permute.xlu0 %1961
        %1963 = vrot.lane.b32.xlu0 %v1701, 64
        %v1964 = vpop.permute.xlu0 %1963
        %1965 = vrot.lane.b32.xlu0 %v1702, 64
        %v1966 = vpop.permute.xlu0 %1965
        %1967 = vrot.lane.b32.xlu0 %v1703, 64
        %v1968 = vpop.permute.xlu0 %1967
        %1969 = vrot.lane.b32.xlu0 %v1704, 64
        %v1970 = vpop.permute.xlu0 %1969
        %1971 = vrot.lane.b32.xlu0 %v1705, 64
        %v1972 = vpop.permute.xlu0 %1971
        %1973 = vrot.lane.b32.xlu0 %v1706, 64
        %v1974 = vpop.permute.xlu0 %1973
        %1975 = vrot.lane.b32.xlu0 %v1707, 64
        %v1976 = vpop.permute.xlu0 %1975
        %1977 = vrot.lane.b32.xlu0 %v1708, 64
        %v1978 = vpop.permute.xlu0 %1977
        %1979 = vrot.lane.b32.xlu0 %v1709, 64
        %v1980 = vpop.permute.xlu0 %1979
        %1981 = vrot.lane.b32.xlu0 %v1710, 64
        %v1982 = vpop.permute.xlu0 %1981
        %1983 = vrot.lane.b32.xlu0 %v1711, 64
        %v1984 = vpop.permute.xlu0 %1983
        %1985 = vrot.lane.b32.xlu0 %v1712, 64
        %v1986 = vpop.permute.xlu0 %1985
        %1987 = vrot.lane.b32.xlu0 %v1713, 64
        %v1988 = vpop.permute.xlu0 %1987
        %1989 = vrot.lane.b32.xlu0 %v1714, 64
        %v1990 = vpop.permute.xlu0 %1989
        %1991 = vrot.lane.b32.xlu0 %v1715, 64
        %v1992 = vpop.permute.xlu0 %1991
        %1993 = vrot.lane.b32.xlu0 %v1716, 64
        %v1994 = vpop.permute.xlu0 %1993
        %1995 = vrot.lane.b32.xlu0 %v1717, 64
        %v1996 = vpop.permute.xlu0 %1995
        %1997 = vrot.lane.b32.xlu0 %v1718, 64
        %v1998 = vpop.permute.xlu0 %1997
        %1999 = vrot.lane.b32.xlu0 %v1719, 64
        %v2000 = vpop.permute.xlu0 %1999
        %2001 = vrot.lane.b32.xlu0 %v1720, 64
        %v2002 = vpop.permute.xlu0 %2001
        %2003 = vrot.lane.b32.xlu0 %v1721, 64
        %v2004 = vpop.permute.xlu0 %2003
        %2005 = vrot.lane.b32.xlu0 %v1722, 64
        %v2006 = vpop.permute.xlu0 %2005
        %2007 = vrot.lane.b32.xlu0 %v1723, 64
        %v2008 = vpop.permute.xlu0 %2007
        %2009 = vrot.lane.b32.xlu0 %v1724, 64
        %v2010 = vpop.permute.xlu0 %2009
        %2011 = vrot.lane.b32.xlu0 %v1725, 64
        %v2012 = vpop.permute.xlu0 %2011
        %2013 = vrot.lane.b32.xlu0 %v1726, 64
        %v2014 = vpop.permute.xlu0 %2013
        %2079 = vrot.lane.b32.xlu0 %v1759, 96
        %v2080 = vpop.permute.xlu0 %2079
        %2081 = vrot.lane.b32.xlu0 %v1760, 96
        %v2082 = vpop.permute.xlu0 %2081
        %2083 = vrot.lane.b32.xlu0 %v1761, 96
        %v2084 = vpop.permute.xlu0 %2083
        %2085 = vrot.lane.b32.xlu0 %v1762, 96
        %v2086 = vpop.permute.xlu0 %2085
        %2087 = vrot.lane.b32.xlu0 %v1763, 96
        %v2088 = vpop.permute.xlu0 %2087
        %2089 = vrot.lane.b32.xlu0 %v1764, 96
        %v2090 = vpop.permute.xlu0 %2089
        %2091 = vrot.lane.b32.xlu0 %v1765, 96
        %v2092 = vpop.permute.xlu0 %2091
        %2093 = vrot.lane.b32.xlu0 %v1766, 96
        %v2094 = vpop.permute.xlu0 %2093
        %2095 = vrot.lane.b32.xlu0 %v1767, 96
        %v2096 = vpop.permute.xlu0 %2095
        %2097 = vrot.lane.b32.xlu0 %v1768, 96
        %v2098 = vpop.permute.xlu0 %2097
        %2099 = vrot.lane.b32.xlu0 %v1769, 96
        %v2100 = vpop.permute.xlu0 %2099
        %2101 = vrot.lane.b32.xlu0 %v1770, 96
        %v2102 = vpop.permute.xlu0 %2101
        %2103 = vrot.lane.b32.xlu0 %v1771, 96
        %v2104 = vpop.permute.xlu0 %2103
        %2105 = vrot.lane.b32.xlu0 %v1772, 96
        %v2106 = vpop.permute.xlu0 %2105
        %2107 = vrot.lane.b32.xlu0 %v1773, 96
        %v2108 = vpop.permute.xlu0 %2107
        %2109 = vrot.lane.b32.xlu0 %v1774, 96
        %v2110 = vpop.permute.xlu0 %2109
        %2111 = vrot.lane.b32.xlu0 %v1775, 96
        %v2112 = vpop.permute.xlu0 %2111
        %2113 = vrot.lane.b32.xlu0 %v1776, 96
        %v2114 = vpop.permute.xlu0 %2113
        %2115 = vrot.lane.b32.xlu0 %v1777, 96
        %v2116 = vpop.permute.xlu0 %2115
        %2117 = vrot.lane.b32.xlu0 %v1778, 96
        %v2118 = vpop.permute.xlu0 %2117
        %2119 = vrot.lane.b32.xlu0 %v1779, 96
        %v2120 = vpop.permute.xlu0 %2119
        %2121 = vrot.lane.b32.xlu0 %v1780, 96
        %v2122 = vpop.permute.xlu0 %2121
        %2123 = vrot.lane.b32.xlu0 %v1781, 96
        %v2124 = vpop.permute.xlu0 %2123
        %2125 = vrot.lane.b32.xlu0 %v1782, 96
        %v2126 = vpop.permute.xlu0 %2125
        %2127 = vrot.lane.b32.xlu0 %v1783, 96
        %v2128 = vpop.permute.xlu0 %2127
        %2129 = vrot.lane.b32.xlu0 %v1784, 96
        %v2130 = vpop.permute.xlu0 %2129
        %2131 = vrot.lane.b32.xlu0 %v1785, 96
        %v2132 = vpop.permute.xlu0 %2131
        %2133 = vrot.lane.b32.xlu0 %v1786, 96
        %v2134 = vpop.permute.xlu0 %2133
        %2135 = vrot.lane.b32.xlu0 %v1787, 96
        %v2136 = vpop.permute.xlu0 %2135
        %2137 = vrot.lane.b32.xlu0 %v1788, 96
        %v2138 = vpop.permute.xlu0 %2137
        %2139 = vrot.lane.b32.xlu0 %v1789, 96
        %v2140 = vpop.permute.xlu0 %2139
        %2141 = vrot.lane.b32.xlu0 %v1790, 96
        %v2142 = vpop.permute.xlu0 %2141
        %v2175 = vsel %vm559, %v1567, %v1824
        %v2176 = vsel %vm559, %v1568, %v1826
        %v2177 = vsel %vm559, %v1569, %v1828
        %v2178 = vsel %vm559, %v1570, %v1830
        %v2179 = vsel %vm559, %v1571, %v1832
        %v2180 = vsel %vm559, %v1572, %v1834
        %v2181 = vsel %vm559, %v1573, %v1836
        %v2182 = vsel %vm559, %v1574, %v1838
        %v2183 = vsel %vm559, %v1575, %v1840
        %v2184 = vsel %vm559, %v1576, %v1842
        %v2185 = vsel %vm559, %v1577, %v1844
        %v2186 = vsel %vm559, %v1578, %v1846
        %v2187 = vsel %vm559, %v1579, %v1848
        %v2188 = vsel %vm559, %v1580, %v1850
        %v2189 = vsel %vm559, %v1581, %v1852
        %v2190 = vsel %vm559, %v1582, %v1854
        %v2191 = vsel %vm559, %v1583, %v1856
        %v2192 = vsel %vm559, %v1584, %v1858
        %v2193 = vsel %vm559, %v1585, %v1860
        %v2194 = vsel %vm559, %v1586, %v1862
        %v2195 = vsel %vm559, %v1587, %v1864
        %v2196 = vsel %vm559, %v1588, %v1866
        %v2197 = vsel %vm559, %v1589, %v1868
        %v2198 = vsel %vm559, %v1590, %v1870
        %v2199 = vsel %vm559, %v1591, %v1872
        %v2200 = vsel %vm559, %v1592, %v1874
        %v2201 = vsel %vm559, %v1593, %v1876
        %v2202 = vsel %vm559, %v1594, %v1878
        %v2203 = vsel %vm559, %v1595, %v1880
        %v2204 = vsel %vm559, %v1596, %v1882
        %v2205 = vsel %vm559, %v1597, %v1884
        %v2206 = vsel %vm559, %v1598, %v1886
        %vm2207 = vcmask 523264
        %v2208 = vsel %vm2207, %v2175, %v1952
        %v2209 = vsel %vm2207, %v2176, %v1954
        %v2210 = vsel %vm2207, %v2177, %v1956
        %v2211 = vsel %vm2207, %v2178, %v1958
        %v2212 = vsel %vm2207, %v2179, %v1960
        %v2213 = vsel %vm2207, %v2180, %v1962
        %v2214 = vsel %vm2207, %v2181, %v1964
        %v2215 = vsel %vm2207, %v2182, %v1966
        %v2216 = vsel %vm2207, %v2183, %v1968
        %v2217 = vsel %vm2207, %v2184, %v1970
        %v2218 = vsel %vm2207, %v2185, %v1972
        %v2219 = vsel %vm2207, %v2186, %v1974
        %v2220 = vsel %vm2207, %v2187, %v1976
        %v2221 = vsel %vm2207, %v2188, %v1978
        %v2222 = vsel %vm2207, %v2189, %v1980
        %v2223 = vsel %vm2207, %v2190, %v1982
        %v2224 = vsel %vm2207, %v2191, %v1984
        %v2225 = vsel %vm2207, %v2192, %v1986
        %v2226 = vsel %vm2207, %v2193, %v1988
        %v2227 = vsel %vm2207, %v2194, %v1990
        %v2228 = vsel %vm2207, %v2195, %v1992
        %v2229 = vsel %vm2207, %v2196, %v1994
        %v2230 = vsel %vm2207, %v2197, %v1996
        %v2231 = vsel %vm2207, %v2198, %v1998
        %v2232 = vsel %vm2207, %v2199, %v2000
        %v2233 = vsel %vm2207, %v2200, %v2002
        %v2234 = vsel %vm2207, %v2201, %v2004
        %v2235 = vsel %vm2207, %v2202, %v2006
        %v2236 = vsel %vm2207, %v2203, %v2008
        %v2237 = vsel %vm2207, %v2204, %v2010
        %v2238 = vsel %vm2207, %v2205, %v2012
        %v2239 = vsel %vm2207, %v2206, %v2014
        %vm2240 = vcmask 785408
        %v2241 = vsel %vm2240, %v2208, %v2080
        %v2242 = vsel %vm2240, %v2209, %v2082
        %v2243 = vsel %vm2240, %v2210, %v2084
        %v2244 = vsel %vm2240, %v2211, %v2086
        %v2245 = vsel %vm2240, %v2212, %v2088
        %v2246 = vsel %vm2240, %v2213, %v2090
        %v2247 = vsel %vm2240, %v2214, %v2092
        %v2248 = vsel %vm2240, %v2215, %v2094
        %v2249 = vsel %vm2240, %v2216, %v2096
        %v2250 = vsel %vm2240, %v2217, %v2098
        %v2251 = vsel %vm2240, %v2218, %v2100
        %v2252 = vsel %vm2240, %v2219, %v2102
        %v2253 = vsel %vm2240, %v2220, %v2104
        %v2254 = vsel %vm2240, %v2221, %v2106
        %v2255 = vsel %vm2240, %v2222, %v2108
        %v2256 = vsel %vm2240, %v2223, %v2110
        %v2257 = vsel %vm2240, %v2224, %v2112
        %v2258 = vsel %vm2240, %v2225, %v2114
        %v2259 = vsel %vm2240, %v2226, %v2116
        %v2260 = vsel %vm2240, %v2227, %v2118
        %v2261 = vsel %vm2240, %v2228, %v2120
        %v2262 = vsel %vm2240, %v2229, %v2122
        %v2263 = vsel %vm2240, %v2230, %v2124
        %v2264 = vsel %vm2240, %v2231, %v2126
        %v2265 = vsel %vm2240, %v2232, %v2128
        %v2266 = vsel %vm2240, %v2233, %v2130
        %v2267 = vsel %vm2240, %v2234, %v2132
        %v2268 = vsel %vm2240, %v2235, %v2134
        %v2269 = vsel %vm2240, %v2236, %v2136
        %v2270 = vsel %vm2240, %v2237, %v2138
        %v2271 = vsel %vm2240, %v2238, %v2140
        %v2272 = vsel %vm2240, %v2239, %v2142
        %v2273 = vadd.f32 %v2241, %v1503
        %v2274 = vadd.f32 %v2242, %v1504
        %v2275 = vadd.f32 %v2243, %v1505
        %v2276 = vadd.f32 %v2244, %v1506
        %v2277 = vadd.f32 %v2245, %v1507
        %v2278 = vadd.f32 %v2246, %v1508
        %v2279 = vadd.f32 %v2247, %v1509
        %v2280 = vadd.f32 %v2248, %v1510
        %v2281 = vadd.f32 %v2249, %v1511
        %v2282 = vadd.f32 %v2250, %v1512
        %v2283 = vadd.f32 %v2251, %v1513
        %v2284 = vadd.f32 %v2252, %v1514
        %v2285 = vadd.f32 %v2253, %v1515
        %v2286 = vadd.f32 %v2254, %v1516
        %v2287 = vadd.f32 %v2255, %v1517
        %v2288 = vadd.f32 %v2256, %v1518
        %v2289 = vadd.f32 %v2257, %v1519
        %v2290 = vadd.f32 %v2258, %v1520
        %v2291 = vadd.f32 %v2259, %v1521
        %v2292 = vadd.f32 %v2260, %v1522
        %v2293 = vadd.f32 %v2261, %v1523
        %v2294 = vadd.f32 %v2262, %v1524
        %v2295 = vadd.f32 %v2263, %v1525
        %v2296 = vadd.f32 %v2264, %v1526
        %v2297 = vadd.f32 %v2265, %v1527
        %v2298 = vadd.f32 %v2266, %v1528
        %v2299 = vadd.f32 %v2267, %v1529
        %v2300 = vadd.f32 %v2268, %v1530
        %v2301 = vadd.f32 %v2269, %v1531
        %v2302 = vadd.f32 %v2270, %v1532
        %v2303 = vadd.f32 %v2271, %v1533
        %v2304 = vadd.f32 %v2272, %v1534
        %v2305 = vmax.f32 %v2273, 0.0
        %v2306 = vmax.f32 %v2274, 0.0
        %v2307 = vmax.f32 %v2275, 0.0
        %v2308 = vmax.f32 %v2276, 0.0
        %v2309 = vmax.f32 %v2277, 0.0
        %v2310 = vmax.f32 %v2278, 0.0
        %v2311 = vmax.f32 %v2279, 0.0
        %v2312 = vmax.f32 %v2280, 0.0
        %v2313 = vmax.f32 %v2281, 0.0
        %v2314 = vmax.f32 %v2282, 0.0
        %v2315 = vmax.f32 %v2283, 0.0
        %v2316 = vmax.f32 %v2284, 0.0
        %v2317 = vmax.f32 %v2285, 0.0
        %v2318 = vmax.f32 %v2286, 0.0
        %v2319 = vmax.f32 %v2287, 0.0
        %v2320 = vmax.f32 %v2288, 0.0
        %v2321 = vmax.f32 %v2289, 0.0
        %v2322 = vmax.f32 %v2290, 0.0
        %v2323 = vmax.f32 %v2291, 0.0
        %v2324 = vmax.f32 %v2292, 0.0
        %v2325 = vmax.f32 %v2293, 0.0
        %v2326 = vmax.f32 %v2294, 0.0
        %v2327 = vmax.f32 %v2295, 0.0
        %v2328 = vmax.f32 %v2296, 0.0
        %v2329 = vmax.f32 %v2297, 0.0
        %v2330 = vmax.f32 %v2298, 0.0
        %v2331 = vmax.f32 %v2299, 0.0
        %v2332 = vmax.f32 %v2300, 0.0
        %v2333 = vmax.f32 %v2301, 0.0
        %v2334 = vmax.f32 %v2302, 0.0
        %v2335 = vmax.f32 %v2303, 0.0
        %v2336 = vmax.f32 %v2304, 0.0
        %2337 = vst [vmem:[%s369] sm:$0xff] %v2305
        %2338 = vst [vmem:[%s369 + $0x8] sm:$0xff] %v2306
        %2339 = vst [vmem:[%s369 + $0x10] sm:$0xff] %v2307
        %2340 = vst [vmem:[%s369 + $0x18] sm:$0xff] %v2308
        %2341 = vst [vmem:[%s369 + $0x20] sm:$0xff] %v2309
        %2342 = vst [vmem:[%s369 + $0x28] sm:$0xff] %v2310
        %2343 = vst [vmem:[%s369 + $0x30] sm:$0xff] %v2311
        %2344 = vst [vmem:[%s369 + $0x38] sm:$0xff] %v2312
        %2345 = vst [vmem:[%s369 + $0x40] sm:$0xff] %v2313
        %2346 = vst [vmem:[%s369 + $0x48] sm:$0xff] %v2314
        %2347 = vst [vmem:[%s369 + $0x50] sm:$0xff] %v2315
        %2348 = vst [vmem:[%s369 + $0x58] sm:$0xff] %v2316
        %2349 = vst [vmem:[%s369 + $0x60] sm:$0xff] %v2317
        %2350 = vst [vmem:[%s369 + $0x68] sm:$0xff] %v2318
        %2351 = vst [vmem:[%s369 + $0x70] sm:$0xff] %v2319
        %2352 = vst [vmem:[%s369 + $0x78] sm:$0xff] %v2320
        %2353 = vst [vmem:[%s369 + $0x80] sm:$0xff] %v2321
        %2354 = vst [vmem:[%s369 + $0x88] sm:$0xff] %v2322
        %2355 = vst [vmem:[%s369 + $0x90] sm:$0xff] %v2323
        %2356 = vst [vmem:[%s369 + $0x98] sm:$0xff] %v2324
        %2357 = vst [vmem:[%s369 + $0xa0] sm:$0xff] %v2325
        %2358 = vst [vmem:[%s369 + $0xa8] sm:$0xff] %v2326
        %2359 = vst [vmem:[%s369 + $0xb0] sm:$0xff] %v2327
        %2360 = vst [vmem:[%s369 + $0xb8] sm:$0xff] %v2328
        %2361 = vst [vmem:[%s369 + $0xc0] sm:$0xff] %v2329
        %2362 = vst [vmem:[%s369 + $0xc8] sm:$0xff] %v2330
        %2363 = vst [vmem:[%s369 + $0xd0] sm:$0xff] %v2331
        %2364 = vst [vmem:[%s369 + $0xd8] sm:$0xff] %v2332
        %2365 = vst [vmem:[%s369 + $0xe0] sm:$0xff] %v2333
        %2366 = vst [vmem:[%s369 + $0xe8] sm:$0xff] %v2334
        %2367 = vst [vmem:[%s369 + $0xf0] sm:$0xff] %v2335
        %2368 = vst [vmem:[%s369 + $0xf8] sm:$0xff] %v2336
        %s2369 = sand.u32 %s252, 1
        %s2370 = scalar_lea.sflag [#allocation3], %s2369
        %s2371 = sand.u32 %s252, 1
        %s2372 = smul.addr %s2371, 256
        %s2373 = scalar_lea.vmem [#allocation2], %s2372
        // Predicated region
        $region61: #{tpu_custom_call.1} parent=59 // pred_check
          %p2374 = pneg %p262
        $region62: #{tpu_custom_call.1} parent=59 // pred_check_branch
          %2376 = sbr.rel (%p2374) target = $region64
        $region63: #{tpu_custom_call.1} parent=59 // pred_region
          %s2377 = smul.u32 32, %s24
          %s2379 = ssub.s32 4096, 4096
          %2380 = vsyncadd %s2370, %s2379
          %s2381 = smul.addr %s2377, 128
          %s2382 = scalar_lea.hbm %s10, %s2381
          %s2383 = sshll.u32 %s2373, 4
          %s2384 = int_to_ptr.vmem [resolvable:$true] %s2383
          %2389 = dma.vmem_to_hbm [thread:$0]  %s2384, 4096, %s2382, %s2370, 128, 128, 8
        $region64: #{tpu_custom_call.1} parent=59 // pred_fallthru
          _
      $region60: #{tpu_custom_call.1} parent=5 // pred_fallthru
        _
      %p2390 = scmp.le.s32.totalorder 2, %s19
      // Predicated region
      $region65: #{tpu_custom_call.1} parent=5 // pred_check
        %p2391 = pneg %p2390
      $region66: #{tpu_custom_call.1} parent=5 // pred_check_branch
        %2393 = sbr.rel (%p2391) target = $region68
      $region67: #{tpu_custom_call.1} parent=5 // pred_region
        %s2394 = ssub.s32 %s19, 2
        // Predicated region
        $region69: #{tpu_custom_call.1} parent=67 // pred_check
          %p2395 = pneg %p268
        $region70: #{tpu_custom_call.1} parent=67 // pred_check_branch
          %2397 = sbr.rel (%p2395) target = $region72
        $region71: #{tpu_custom_call.1} parent=67 // pred_region
          %s2398 = sand.u32 %s253, 1
          %s2399 = scalar_lea.sflag [#allocation3], %s2398
          %s2400 = sand.u32 %s253, 1
          %s2401 = smul.addr %s2400, 256
          %s2402 = scalar_lea.vmem [#allocation2], %s2401
          %2403 = dma.done %s2399, 4096
        $region72: #{tpu_custom_call.1} parent=67 // pred_fallthru
          _
      $region68: #{tpu_custom_call.1} parent=5 // pred_fallthru
        _
    $region6: #{tpu_custom_call.1} parent=1 // loop_footer
      %s23 = sadd.s32 1, %s19
    $region7: #{tpu_custom_call.1} parent=1 // loop_footer_branch
      %18 = sbr.rel target = $region3
    $region8: #{tpu_custom_call.1} parent=1 // loop_exit
      _
    %2404 = vsyncpa [#allocation3], 1
    %s2405 = scalar_lea.sflag [#allocation3], 1
    %2406 = vsyncpa %s2405, 1

</llo_original>
